<compile_context>
chip_gen: v7x
topology: tpu7x:2x2x1
jax: 0.10.0
libtpu: 0.0.40
codegen_flags: <defaults>
</compile_context>

<pallas_src>
import functools

import jax
import jax.numpy as jnp
import numpy as np
from jax import lax
from jax.experimental import pallas as pl
from jax.experimental.pallas import tpu as pltpu


def _round_up(x, m):
    return (x + m - 1) // m * m


def _dilate_conv_kernel(x_ref, w_ref, o_ref, xflat_ref, p_ref,
                        *, H, W, Cin_pad, Cout, dilations, base):
    """One batch element per grid step.

    x_ref    : (1, Cin_pad, H*W)      flattened NCHW input rows (VMEM)
    w_ref    : (nd, Cout, 9*Cin_pad)  per-dilation folded weights (VMEM)
    o_ref    : (1, nd*Cout, H*W)      concatenated, flattened output (VMEM)
    xflat_ref: (Cin_pad, L)           zero-haloed flat image scratch (VMEM)
    p_ref    : (9*Cin_pad, H*W)       im2col scratch, reused across dilations
    """
    HW = H * W
    L = xflat_ref.shape[1]

    # Zero only the halo columns (the kernel never writes them below); the
    # image window [base, base+HW) is fully rewritten every step.
    xflat_ref[:, :base] = jnp.zeros((Cin_pad, base), xflat_ref.dtype)
    xflat_ref[:, base + HW:] = jnp.zeros((Cin_pad, L - base - HW),
                                         xflat_ref.dtype)
    xflat_ref[:, base:base + HW] = x_ref[0]

    # Horizontal-edge masks, one per unique column shift, at (1, H*W) and
    # broadcast in the select.  col[q] = q mod W = output column of pixel q.
    col = lax.broadcasted_iota(jnp.int32, (1, HW), 1) % W
    masks = {}
    for d in dilations:
        for sx in (-d, d):
            if sx not in masks:
                masks[sx] = (col + sx >= 0) & (col + sx < W)

    # One dilation at a time: fill the reused im2col scratch with 9 shifted,
    # edge-masked contiguous ref-slices of the haloed flat image, run one MXU
    # matmul, and store that dilation's output slab (lane-dense: HW on lanes).
    for n, d in enumerate(dilations):
        for kh in range(3):
            for kw in range(3):
                g = 3 * kh + kw
                s = base + (kh - 1) * d * W + (kw - 1) * d   # static offset
                tap = xflat_ref[:, s:s + HW]                 # (Cin_pad, HW)
                sx = (kw - 1) * d
                if sx != 0:
                    tap = jnp.where(masks[sx], tap, jnp.zeros_like(tap))
                p_ref[g * Cin_pad:(g + 1) * Cin_pad, :] = tap
        acc = jnp.dot(w_ref[n], p_ref[...],
                      preferred_element_type=jnp.float32)    # (Cout, HW)
        o_ref[0, n * Cout:(n + 1) * Cout, :] = acc.astype(o_ref.dtype)


def dilate_conv_block_epanet(x_nchw, w1, w2, w3, dilations=(1, 2, 5),
                             compute_dtype=jnp.float32):
    """Forward pass matching the PyTorch module.

    x_nchw : (B, Cin, H, W) float32
    wN     : (Cout, Cin, 3, 3) float32  (OIHW, same as nn.Conv2d.weight)
    returns: (B, 3*Cout, H, W) float32
    """
    B, Cin, H, W = x_nchw.shape
    Cout = w1.shape[0]
    nd = len(dilations)
    pad = max(dilations)
    HW = H * W
    out_dtype = x_nchw.dtype

    # Sublane-align the contraction channel count (f32 pack = 8, bf16 = 16).
    cpack = 16 if compute_dtype == jnp.bfloat16 else 8
    Cin_pad = _round_up(Cin, cpack)

    # Stack the three OIHW weights as (nd, Cout, 9*Cin_pad), K ordered
    # (kh, kw, cin) to match the in-kernel im2col row order.  No zero
    # block-diagonal matrix is materialized.
    ws = []
    for w in (w1, w2, w3):
        w_k = jnp.transpose(w, (0, 2, 3, 1))                 # (Cout, 3, 3, Cin)
        if Cin_pad != Cin:
            w_k = jnp.pad(w_k, ((0, 0), (0, 0), (0, 0), (0, Cin_pad - Cin)))
        ws.append(w_k.reshape(Cout, 9 * Cin_pad))
    w_stack = jnp.stack(ws, axis=0).astype(compute_dtype)

    # Pad input channels to the sublane multiple; layout plumbing only.
    if Cin_pad != Cin:
        x_nchw = jnp.pad(x_nchw, ((0, 0), (0, Cin_pad - Cin), (0, 0), (0, 0)))
    x_flat = x_nchw.reshape(B, Cin_pad, HW).astype(compute_dtype)

    # Flat-scratch geometry: the image starts at `base` (lane aligned), with a
    # zero halo of at least pad*W + pad elements on either side.
    halo = pad * W + pad
    base = _round_up(halo, 128)
    L = _round_up(base + HW + halo, 128)

    kernel = functools.partial(
        _dilate_conv_kernel, H=H, W=W, Cin_pad=Cin_pad, Cout=Cout,
        dilations=tuple(dilations), base=base)

    # Raise the scoped VMEM limit above the default if the working set needs it.
    isz = jnp.dtype(compute_dtype).itemsize
    vmem_est = (2 * Cin_pad * HW * isz                              # input dbl-buf
                + 2 * nd * Cout * 9 * Cin_pad * isz                 # weights
                + 2 * nd * Cout * HW * jnp.dtype(out_dtype).itemsize  # out dbl-buf
                + Cin_pad * L * isz                                  # haloed image
                + 9 * Cin_pad * HW * isz)                            # im2col scratch
    vmem_limit = int(min(100 * 2**20, max(32 * 2**20, int(vmem_est * 1.5))))

    out_flat = pl.pallas_call(
        kernel,
        out_shape=jax.ShapeDtypeStruct((B, nd * Cout, HW), out_dtype),
        grid_spec=pltpu.PrefetchScalarGridSpec(
            num_scalar_prefetch=0,
            grid=(B,),
            in_specs=[
                pl.BlockSpec((1, Cin_pad, HW), lambda b: (b, 0, 0)),
                pl.BlockSpec((nd, Cout, 9 * Cin_pad), lambda b: (0, 0, 0)),
            ],
            out_specs=pl.BlockSpec((1, nd * Cout, HW), lambda b: (b, 0, 0)),
            scratch_shapes=[
                pltpu.VMEM((Cin_pad, L), compute_dtype),       # haloed flat image
                pltpu.VMEM((9 * Cin_pad, HW), compute_dtype),  # reused im2col
            ],
        ),
        compiler_params=pltpu.CompilerParams(
            dimension_semantics=("parallel",),
            vmem_limit_bytes=vmem_limit),
    )(x_flat, w_stack)

    # (B, 3*Cout, H*W) -> (B, 3*Cout, H, W): matches torch.cat(..., dim=1).
    return out_flat.reshape(B, nd * Cout, H, W)


def _reference(x_nchw, w1, w2, w3, dilations=(1, 2, 5)):
    """Pure-JAX reference using lax.conv_general_dilated (NCHW / OIHW)."""
    outs = []
    for w, d in zip((w1, w2, w3), dilations):
        y = lax.conv_general_dilated(
            x_nchw, w,
            window_strides=(1, 1),
            padding=[(d, d), (d, d)],
            rhs_dilation=(d, d),
            dimension_numbers=("NCHW", "OIHW", "NCHW"))
        outs.append(y)
    return jnp.concatenate(outs, axis=1)


if __name__ == "__main__":
    # Small deterministic shapes consistent with the module.
    B, Cin, Cout, H, W = 2, 4, 4, 16, 16

    key = jax.random.PRNGKey(0)
    kx, k1, k2, k3 = jax.random.split(key, 4)

    x = jax.random.normal(kx, (B, Cin, H, W), dtype=jnp.float32)
    # Deterministic weight init (OIHW, like nn.Conv2d.weight), Kaiming-ish scale.
    scale = 1.0 / np.sqrt(Cin * 3 * 3)
    w1 = jax.random.uniform(k1, (Cout, Cin, 3, 3), jnp.float32, -scale, scale)
    w2 = jax.random.uniform(k2, (Cout, Cin, 3, 3), jnp.float32, -scale, scale)
    w3 = jax.random.uniform(k3, (Cout, Cin, 3, 3), jnp.float32, -scale, scale)

    out = dilate_conv_block_epanet(x, w1, w2, w3)
    out = jax.block_until_ready(out)

    ref = jax.block_until_ready(_reference(x, w1, w2, w3))
    assert out.shape == (B, 3 * Cout, H, W), out.shape
    np.testing.assert_allclose(np.asarray(out), np.asarray(ref),
                               rtol=1e-5, atol=1e-5)

    print("KERNEL_OK")
</pallas_src>

<mosaic_0001>
module attributes {stable_mosaic.version = 11 : i64} {
  func.func @_dilate_conv_kernel(%arg0: i32, %arg1: memref<1x8x256xf32, #tpu.memory_space<vmem>>, %arg2: memref<3x4x72xf32, #tpu.memory_space<vmem>>, %arg3: memref<1x12x256xf32, #tpu.memory_space<vmem>>, %arg4: memref<8x512xf32, #tpu.memory_space<vmem>>, %arg5: memref<72x256xf32, #tpu.memory_space<vmem>>) attributes {dimension_semantics = [#tpu.dimension_semantics<parallel>], iteration_bounds = array<i64: 2>, scalar_prefetch = 0 : i64, scratch_operands = 2 : i64, tpu.core_type = #tpu.core_type<tc>, window_params = [{transform_indices = @transform_0, window_bounds = array<i64: 1, 8, 256>}, {pipeline_mode = #tpu.pipeline_mode<synchronous>, transform_indices = @transform_1, window_bounds = array<i64: 3, 4, 72>}, {transform_indices = @transform_2, window_bounds = array<i64: 1, 12, 256>}]} {
    %cst = arith.constant 0.000000e+00 : f32
    %0 = vector.broadcast %cst : f32 to vector<8x128xf32>
    %c0 = arith.constant 0 : index
    %c0_0 = arith.constant 0 : index
    %1 = vector.load %arg4[%c0, %c0_0] : memref<8x512xf32, #tpu.memory_space<vmem>>, vector<8x128xf32>
    tpu.vector_store %arg4[%c0, %c0_0], %0 {strides = array<i32>} : memref<8x512xf32, #tpu.memory_space<vmem>>, vector<8x128xf32>,
    %cst_1 = arith.constant 0.000000e+00 : f32
    %2 = vector.broadcast %cst_1 : f32 to vector<8x128xf32>
    %c0_2 = arith.constant 0 : index
    %c384 = arith.constant 384 : index
    %3 = vector.load %arg4[%c0_2, %c384] : memref<8x512xf32, #tpu.memory_space<vmem>>, vector<8x128xf32>
    tpu.vector_store %arg4[%c0_2, %c384], %2 {strides = array<i32>} : memref<8x512xf32, #tpu.memory_space<vmem>>, vector<8x128xf32>,
    %c0_3 = arith.constant 0 : index
    %c0_4 = arith.constant 0 : index
    %c0_5 = arith.constant 0 : index
    %4 = vector.load %arg1[%c0_3, %c0_4, %c0_5] : memref<1x8x256xf32, #tpu.memory_space<vmem>>, vector<1x8x256xf32>
    %5 = vector.shape_cast %4 : vector<1x8x256xf32> to vector<8x256xf32>
    %c0_6 = arith.constant 0 : index
    %c128 = arith.constant 128 : index
    %6 = vector.load %arg4[%c0_6, %c128] : memref<8x512xf32, #tpu.memory_space<vmem>>, vector<8x256xf32>
    tpu.vector_store %arg4[%c0_6, %c128], %5 {strides = array<i32>} : memref<8x512xf32, #tpu.memory_space<vmem>>, vector<8x256xf32>,
    %7 = tpu.iota {dimensions = array<i32: 1>} : vector<1x256xi32>
    %c16_i32 = arith.constant 16 : i32
    %c0_i32 = arith.constant 0 : i32
    %8 = arith.cmpi eq, %c16_i32, %c0_i32 : i32
    %c1_i32 = arith.constant 1 : i32
    %9 = arith.select %8, %c1_i32, %c16_i32 : i32
    %10 = vector.broadcast %9 : i32 to vector<1x256xi32>
    %11 = arith.remsi %7, %10 : vector<1x256xi32>
    %c0_i32_7 = arith.constant 0 : i32
    %12 = vector.broadcast %c0_i32_7 : i32 to vector<1x256xi32>
    %13 = arith.cmpi ne, %11, %12 : vector<1x256xi32>
    %c0_i32_8 = arith.constant 0 : i32
    %14 = vector.broadcast %c0_i32_8 : i32 to vector<1x256xi32>
    %15 = arith.cmpi slt, %11, %14 : vector<1x256xi32>
    %c0_i32_9 = arith.constant 0 : i32
    %16 = arith.cmpi slt, %9, %c0_i32_9 : i32
    %17 = vector.broadcast %16 : i1 to vector<1x256xi1>
    %18 = vector.broadcast %17 : vector<1x256xi1> to vector<1x256xi1>
    %19 = arith.xori %15, %18 : vector<1x256xi1>
    %20 = arith.andi %19, %13 : vector<1x256xi1>
    %21 = vector.broadcast %9 : i32 to vector<1x256xi32>
    %22 = arith.addi %11, %21 : vector<1x256xi32>
    %23 = arith.select %20, %22, %11 : vector<1x256xi1>, vector<1x256xi32>
    %c-1_i32 = arith.constant -1 : i32
    %24 = vector.broadcast %c-1_i32 : i32 to vector<1x256xi32>
    %25 = arith.addi %23, %24 : vector<1x256xi32>
    %c0_i32_10 = arith.constant 0 : i32
    %26 = vector.broadcast %c0_i32_10 : i32 to vector<1x256xi32>
    %27 = arith.cmpi sge, %25, %26 : vector<1x256xi32>
    %c-1_i32_11 = arith.constant -1 : i32
    %28 = vector.broadcast %c-1_i32_11 : i32 to vector<1x256xi32>
    %29 = arith.addi %23, %28 : vector<1x256xi32>
    %c16_i32_12 = arith.constant 16 : i32
    %30 = vector.broadcast %c16_i32_12 : i32 to vector<1x256xi32>
    %31 = arith.cmpi slt, %29, %30 : vector<1x256xi32>
    %32 = arith.andi %27, %31 : vector<1x256xi1>
    %c1_i32_13 = arith.constant 1 : i32
    %33 = vector.broadcast %c1_i32_13 : i32 to vector<1x256xi32>
    %34 = arith.addi %23, %33 : vector<1x256xi32>
    %c0_i32_14 = arith.constant 0 : i32
    %35 = vector.broadcast %c0_i32_14 : i32 to vector<1x256xi32>
    %36 = arith.cmpi sge, %34, %35 : vector<1x256xi32>
    %c1_i32_15 = arith.constant 1 : i32
    %37 = vector.broadcast %c1_i32_15 : i32 to vector<1x256xi32>
    %38 = arith.addi %23, %37 : vector<1x256xi32>
    %c16_i32_16 = arith.constant 16 : i32
    %39 = vector.broadcast %c16_i32_16 : i32 to vector<1x256xi32>
    %40 = arith.cmpi slt, %38, %39 : vector<1x256xi32>
    %41 = arith.andi %36, %40 : vector<1x256xi1>
    %c-2_i32 = arith.constant -2 : i32
    %42 = vector.broadcast %c-2_i32 : i32 to vector<1x256xi32>
    %43 = arith.addi %23, %42 : vector<1x256xi32>
    %c0_i32_17 = arith.constant 0 : i32
    %44 = vector.broadcast %c0_i32_17 : i32 to vector<1x256xi32>
    %45 = arith.cmpi sge, %43, %44 : vector<1x256xi32>
    %c-2_i32_18 = arith.constant -2 : i32
    %46 = vector.broadcast %c-2_i32_18 : i32 to vector<1x256xi32>
    %47 = arith.addi %23, %46 : vector<1x256xi32>
    %c16_i32_19 = arith.constant 16 : i32
    %48 = vector.broadcast %c16_i32_19 : i32 to vector<1x256xi32>
    %49 = arith.cmpi slt, %47, %48 : vector<1x256xi32>
    %50 = arith.andi %45, %49 : vector<1x256xi1>
    %c2_i32 = arith.constant 2 : i32
    %51 = vector.broadcast %c2_i32 : i32 to vector<1x256xi32>
    %52 = arith.addi %23, %51 : vector<1x256xi32>
    %c0_i32_20 = arith.constant 0 : i32
    %53 = vector.broadcast %c0_i32_20 : i32 to vector<1x256xi32>
    %54 = arith.cmpi sge, %52, %53 : vector<1x256xi32>
    %c2_i32_21 = arith.constant 2 : i32
    %55 = vector.broadcast %c2_i32_21 : i32 to vector<1x256xi32>
    %56 = arith.addi %23, %55 : vector<1x256xi32>
    %c16_i32_22 = arith.constant 16 : i32
    %57 = vector.broadcast %c16_i32_22 : i32 to vector<1x256xi32>
    %58 = arith.cmpi slt, %56, %57 : vector<1x256xi32>
    %59 = arith.andi %54, %58 : vector<1x256xi1>
    %c-5_i32 = arith.constant -5 : i32
    %60 = vector.broadcast %c-5_i32 : i32 to vector<1x256xi32>
    %61 = arith.addi %23, %60 : vector<1x256xi32>
    %c0_i32_23 = arith.constant 0 : i32
    %62 = vector.broadcast %c0_i32_23 : i32 to vector<1x256xi32>
    %63 = arith.cmpi sge, %61, %62 : vector<1x256xi32>
    %c-5_i32_24 = arith.constant -5 : i32
    %64 = vector.broadcast %c-5_i32_24 : i32 to vector<1x256xi32>
    %65 = arith.addi %23, %64 : vector<1x256xi32>
    %c16_i32_25 = arith.constant 16 : i32
    %66 = vector.broadcast %c16_i32_25 : i32 to vector<1x256xi32>
    %67 = arith.cmpi slt, %65, %66 : vector<1x256xi32>
    %68 = arith.andi %63, %67 : vector<1x256xi1>
    %c5_i32 = arith.constant 5 : i32
    %69 = vector.broadcast %c5_i32 : i32 to vector<1x256xi32>
    %70 = arith.addi %23, %69 : vector<1x256xi32>
    %c0_i32_26 = arith.constant 0 : i32
    %71 = vector.broadcast %c0_i32_26 : i32 to vector<1x256xi32>
    %72 = arith.cmpi sge, %70, %71 : vector<1x256xi32>
    %c5_i32_27 = arith.constant 5 : i32
    %73 = vector.broadcast %c5_i32_27 : i32 to vector<1x256xi32>
    %74 = arith.addi %23, %73 : vector<1x256xi32>
    %c16_i32_28 = arith.constant 16 : i32
    %75 = vector.broadcast %c16_i32_28 : i32 to vector<1x256xi32>
    %76 = arith.cmpi slt, %74, %75 : vector<1x256xi32>
    %77 = arith.andi %72, %76 : vector<1x256xi1>
    %c0_29 = arith.constant 0 : index
    %c111 = arith.constant 111 : index
    %78 = vector.load %arg4[%c0_29, %c111] : memref<8x512xf32, #tpu.memory_space<vmem>>, vector<8x256xf32>
    %cst_30 = arith.constant 0.000000e+00 : f32
    %79 = vector.broadcast %cst_30 : f32 to vector<8x256xf32>
    %80 = vector.shape_cast %32 : vector<1x256xi1> to vector<1x256xi1>
    %81 = vector.broadcast %80 : vector<1x256xi1> to vector<8x256xi1>
    %82 = arith.select %81, %78, %79 : vector<8x256xi1>, vector<8x256xf32>
    %c0_31 = arith.constant 0 : index
    %c0_32 = arith.constant 0 : index
    %83 = vector.load %arg5[%c0_31, %c0_32] : memref<72x256xf32, #tpu.memory_space<vmem>>, vector<8x256xf32>
    tpu.vector_store %arg5[%c0_31, %c0_32], %82 {strides = array<i32>} : memref<72x256xf32, #tpu.memory_space<vmem>>, vector<8x256xf32>,
    %c0_33 = arith.constant 0 : index
    %c112 = arith.constant 112 : index
    %84 = vector.load %arg4[%c0_33, %c112] : memref<8x512xf32, #tpu.memory_space<vmem>>, vector<8x256xf32>
    %c8 = arith.constant 8 : index
    %c0_34 = arith.constant 0 : index
    %85 = vector.load %arg5[%c8, %c0_34] : memref<72x256xf32, #tpu.memory_space<vmem>>, vector<8x256xf32>
    tpu.vector_store %arg5[%c8, %c0_34], %84 {strides = array<i32>} : memref<72x256xf32, #tpu.memory_space<vmem>>, vector<8x256xf32>,
    %c0_35 = arith.constant 0 : index
    %c113 = arith.constant 113 : index
    %86 = vector.load %arg4[%c0_35, %c113] : memref<8x512xf32, #tpu.memory_space<vmem>>, vector<8x256xf32>
    %cst_36 = arith.constant 0.000000e+00 : f32
    %87 = vector.broadcast %cst_36 : f32 to vector<8x256xf32>
    %88 = vector.shape_cast %41 : vector<1x256xi1> to vector<1x256xi1>
    %89 = vector.broadcast %88 : vector<1x256xi1> to vector<8x256xi1>
    %90 = arith.select %89, %86, %87 : vector<8x256xi1>, vector<8x256xf32>
    %c16 = arith.constant 16 : index
    %c0_37 = arith.constant 0 : index
    %91 = vector.load %arg5[%c16, %c0_37] : memref<72x256xf32, #tpu.memory_space<vmem>>, vector<8x256xf32>
    tpu.vector_store %arg5[%c16, %c0_37], %90 {strides = array<i32>} : memref<72x256xf32, #tpu.memory_space<vmem>>, vector<8x256xf32>,
    %c0_38 = arith.constant 0 : index
    %c127 = arith.constant 127 : index
    %92 = vector.load %arg4[%c0_38, %c127] : memref<8x512xf32, #tpu.memory_space<vmem>>, vector<8x256xf32>
    %cst_39 = arith.constant 0.000000e+00 : f32
    %93 = vector.broadcast %cst_39 : f32 to vector<8x256xf32>
    %94 = vector.shape_cast %32 : vector<1x256xi1> to vector<1x256xi1>
    %95 = vector.broadcast %94 : vector<1x256xi1> to vector<8x256xi1>
    %96 = arith.select %95, %92, %93 : vector<8x256xi1>, vector<8x256xf32>
    %c24 = arith.constant 24 : index
    %c0_40 = arith.constant 0 : index
    %97 = vector.load %arg5[%c24, %c0_40] : memref<72x256xf32, #tpu.memory_space<vmem>>, vector<8x256xf32>
    tpu.vector_store %arg5[%c24, %c0_40], %96 {strides = array<i32>} : memref<72x256xf32, #tpu.memory_space<vmem>>, vector<8x256xf32>,
    %c0_41 = arith.constant 0 : index
    %c128_42 = arith.constant 128 : index
    %98 = vector.load %arg4[%c0_41, %c128_42] : memref<8x512xf32, #tpu.memory_space<vmem>>, vector<8x256xf32>
    %c32 = arith.constant 32 : index
    %c0_43 = arith.constant 0 : index
    %99 = vector.load %arg5[%c32, %c0_43] : memref<72x256xf32, #tpu.memory_space<vmem>>, vector<8x256xf32>
    tpu.vector_store %arg5[%c32, %c0_43], %98 {strides = array<i32>} : memref<72x256xf32, #tpu.memory_space<vmem>>, vector<8x256xf32>,
    %c0_44 = arith.constant 0 : index
    %c129 = arith.constant 129 : index
    %100 = vector.load %arg4[%c0_44, %c129] : memref<8x512xf32, #tpu.memory_space<vmem>>, vector<8x256xf32>
    %cst_45 = arith.constant 0.000000e+00 : f32
    %101 = vector.broadcast %cst_45 : f32 to vector<8x256xf32>
    %102 = vector.shape_cast %41 : vector<1x256xi1> to vector<1x256xi1>
    %103 = vector.broadcast %102 : vector<1x256xi1> to vector<8x256xi1>
    %104 = arith.select %103, %100, %101 : vector<8x256xi1>, vector<8x256xf32>
    %c40 = arith.constant 40 : index
    %c0_46 = arith.constant 0 : index
    %105 = vector.load %arg5[%c40, %c0_46] : memref<72x256xf32, #tpu.memory_space<vmem>>, vector<8x256xf32>
    tpu.vector_store %arg5[%c40, %c0_46], %104 {strides = array<i32>} : memref<72x256xf32, #tpu.memory_space<vmem>>, vector<8x256xf32>,
    %c0_47 = arith.constant 0 : index
    %c143 = arith.constant 143 : index
    %106 = vector.load %arg4[%c0_47, %c143] : memref<8x512xf32, #tpu.memory_space<vmem>>, vector<8x256xf32>
    %cst_48 = arith.constant 0.000000e+00 : f32
    %107 = vector.broadcast %cst_48 : f32 to vector<8x256xf32>
    %108 = vector.shape_cast %32 : vector<1x256xi1> to vector<1x256xi1>
    %109 = vector.broadcast %108 : vector<1x256xi1> to vector<8x256xi1>
    %110 = arith.select %109, %106, %107 : vector<8x256xi1>, vector<8x256xf32>
    %c48 = arith.constant 48 : index
    %c0_49 = arith.constant 0 : index
    %111 = vector.load %arg5[%c48, %c0_49] : memref<72x256xf32, #tpu.memory_space<vmem>>, vector<8x256xf32>
    tpu.vector_store %arg5[%c48, %c0_49], %110 {strides = array<i32>} : memref<72x256xf32, #tpu.memory_space<vmem>>, vector<8x256xf32>,
    %c0_50 = arith.constant 0 : index
    %c144 = arith.constant 144 : index
    %112 = vector.load %arg4[%c0_50, %c144] : memref<8x512xf32, #tpu.memory_space<vmem>>, vector<8x256xf32>
    %c56 = arith.constant 56 : index
    %c0_51 = arith.constant 0 : index
    %113 = vector.load %arg5[%c56, %c0_51] : memref<72x256xf32, #tpu.memory_space<vmem>>, vector<8x256xf32>
    tpu.vector_store %arg5[%c56, %c0_51], %112 {strides = array<i32>} : memref<72x256xf32, #tpu.memory_space<vmem>>, vector<8x256xf32>,
    %c0_52 = arith.constant 0 : index
    %c145 = arith.constant 145 : index
    %114 = vector.load %arg4[%c0_52, %c145] : memref<8x512xf32, #tpu.memory_space<vmem>>, vector<8x256xf32>
    %cst_53 = arith.constant 0.000000e+00 : f32
    %115 = vector.broadcast %cst_53 : f32 to vector<8x256xf32>
    %116 = vector.shape_cast %41 : vector<1x256xi1> to vector<1x256xi1>
    %117 = vector.broadcast %116 : vector<1x256xi1> to vector<8x256xi1>
    %118 = arith.select %117, %114, %115 : vector<8x256xi1>, vector<8x256xf32>
    %c64 = arith.constant 64 : index
    %c0_54 = arith.constant 0 : index
    %119 = vector.load %arg5[%c64, %c0_54] : memref<72x256xf32, #tpu.memory_space<vmem>>, vector<8x256xf32>
    tpu.vector_store %arg5[%c64, %c0_54], %118 {strides = array<i32>} : memref<72x256xf32, #tpu.memory_space<vmem>>, vector<8x256xf32>,
    %c0_55 = arith.constant 0 : index
    %c0_56 = arith.constant 0 : index
    %c0_57 = arith.constant 0 : index
    %120 = vector.load %arg2[%c0_55, %c0_56, %c0_57] : memref<3x4x72xf32, #tpu.memory_space<vmem>>, vector<1x4x72xf32>
    %121 = vector.shape_cast %120 : vector<1x4x72xf32> to vector<4x72xf32>
    %c0_58 = arith.constant 0 : index
    %c0_59 = arith.constant 0 : index
    %122 = vector.load %arg5[%c0_58, %c0_59] : memref<72x256xf32, #tpu.memory_space<vmem>>, vector<72x256xf32>
    %cst_60 = arith.constant dense<0.000000e+00> : vector<4x256xf32>
    %123 = tpu.matmul %121, %122, %cst_60 {dimension_numbers = #tpu.dot_dimension_numbers<[1], [0], [0], [1], [0, 0, 1, 1], [], []>} : vector<4x72xf32>, vector<72x256xf32>, vector<4x256xf32> -> vector<4x256xf32>
    %c0_61 = arith.constant 0 : index
    %c0_62 = arith.constant 0 : index
    %c0_63 = arith.constant 0 : index
    %124 = vector.load %arg3[%c0_61, %c0_62, %c0_63] : memref<1x12x256xf32, #tpu.memory_space<vmem>>, vector<1x4x256xf32>
    %125 = vector.shape_cast %124 : vector<1x4x256xf32> to vector<4x256xf32>
    %126 = vector.shape_cast %123 : vector<4x256xf32> to vector<1x4x256xf32>
    tpu.vector_store %arg3[%c0_61, %c0_62, %c0_63], %126 {strides = array<i32>} : memref<1x12x256xf32, #tpu.memory_space<vmem>>, vector<1x4x256xf32>,
    %c0_64 = arith.constant 0 : index
    %c94 = arith.constant 94 : index
    %127 = vector.load %arg4[%c0_64, %c94] : memref<8x512xf32, #tpu.memory_space<vmem>>, vector<8x256xf32>
    %cst_65 = arith.constant 0.000000e+00 : f32
    %128 = vector.broadcast %cst_65 : f32 to vector<8x256xf32>
    %129 = vector.shape_cast %50 : vector<1x256xi1> to vector<1x256xi1>
    %130 = vector.broadcast %129 : vector<1x256xi1> to vector<8x256xi1>
    %131 = arith.select %130, %127, %128 : vector<8x256xi1>, vector<8x256xf32>
    %c0_66 = arith.constant 0 : index
    %c0_67 = arith.constant 0 : index
    %132 = vector.load %arg5[%c0_66, %c0_67] : memref<72x256xf32, #tpu.memory_space<vmem>>, vector<8x256xf32>
    tpu.vector_store %arg5[%c0_66, %c0_67], %131 {strides = array<i32>} : memref<72x256xf32, #tpu.memory_space<vmem>>, vector<8x256xf32>,
    %c0_68 = arith.constant 0 : index
    %c96 = arith.constant 96 : index
    %133 = vector.load %arg4[%c0_68, %c96] : memref<8x512xf32, #tpu.memory_space<vmem>>, vector<8x256xf32>
    %c8_69 = arith.constant 8 : index
    %c0_70 = arith.constant 0 : index
    %134 = vector.load %arg5[%c8_69, %c0_70] : memref<72x256xf32, #tpu.memory_space<vmem>>, vector<8x256xf32>
    tpu.vector_store %arg5[%c8_69, %c0_70], %133 {strides = array<i32>} : memref<72x256xf32, #tpu.memory_space<vmem>>, vector<8x256xf32>,
    %c0_71 = arith.constant 0 : index
    %c98 = arith.constant 98 : index
    %135 = vector.load %arg4[%c0_71, %c98] : memref<8x512xf32, #tpu.memory_space<vmem>>, vector<8x256xf32>
    %cst_72 = arith.constant 0.000000e+00 : f32
    %136 = vector.broadcast %cst_72 : f32 to vector<8x256xf32>
    %137 = vector.shape_cast %59 : vector<1x256xi1> to vector<1x256xi1>
    %138 = vector.broadcast %137 : vector<1x256xi1> to vector<8x256xi1>
    %139 = arith.select %138, %135, %136 : vector<8x256xi1>, vector<8x256xf32>
    %c16_73 = arith.constant 16 : index
    %c0_74 = arith.constant 0 : index
    %140 = vector.load %arg5[%c16_73, %c0_74] : memref<72x256xf32, #tpu.memory_space<vmem>>, vector<8x256xf32>
    tpu.vector_store %arg5[%c16_73, %c0_74], %139 {strides = array<i32>} : memref<72x256xf32, #tpu.memory_space<vmem>>, vector<8x256xf32>,
    %c0_75 = arith.constant 0 : index
    %c126 = arith.constant 126 : index
    %141 = vector.load %arg4[%c0_75, %c126] : memref<8x512xf32, #tpu.memory_space<vmem>>, vector<8x256xf32>
    %cst_76 = arith.constant 0.000000e+00 : f32
    %142 = vector.broadcast %cst_76 : f32 to vector<8x256xf32>
    %143 = vector.shape_cast %50 : vector<1x256xi1> to vector<1x256xi1>
    %144 = vector.broadcast %143 : vector<1x256xi1> to vector<8x256xi1>
    %145 = arith.select %144, %141, %142 : vector<8x256xi1>, vector<8x256xf32>
    %c24_77 = arith.constant 24 : index
    %c0_78 = arith.constant 0 : index
    %146 = vector.load %arg5[%c24_77, %c0_78] : memref<72x256xf32, #tpu.memory_space<vmem>>, vector<8x256xf32>
    tpu.vector_store %arg5[%c24_77, %c0_78], %145 {strides = array<i32>} : memref<72x256xf32, #tpu.memory_space<vmem>>, vector<8x256xf32>,
    %c0_79 = arith.constant 0 : index
    %c128_80 = arith.constant 128 : index
    %147 = vector.load %arg4[%c0_79, %c128_80] : memref<8x512xf32, #tpu.memory_space<vmem>>, vector<8x256xf32>
    %c32_81 = arith.constant 32 : index
    %c0_82 = arith.constant 0 : index
    %148 = vector.load %arg5[%c32_81, %c0_82] : memref<72x256xf32, #tpu.memory_space<vmem>>, vector<8x256xf32>
    tpu.vector_store %arg5[%c32_81, %c0_82], %147 {strides = array<i32>} : memref<72x256xf32, #tpu.memory_space<vmem>>, vector<8x256xf32>,
    %c0_83 = arith.constant 0 : index
    %c130 = arith.constant 130 : index
    %149 = vector.load %arg4[%c0_83, %c130] : memref<8x512xf32, #tpu.memory_space<vmem>>, vector<8x256xf32>
    %cst_84 = arith.constant 0.000000e+00 : f32
    %150 = vector.broadcast %cst_84 : f32 to vector<8x256xf32>
    %151 = vector.shape_cast %59 : vector<1x256xi1> to vector<1x256xi1>
    %152 = vector.broadcast %151 : vector<1x256xi1> to vector<8x256xi1>
    %153 = arith.select %152, %149, %150 : vector<8x256xi1>, vector<8x256xf32>
    %c40_85 = arith.constant 40 : index
    %c0_86 = arith.constant 0 : index
    %154 = vector.load %arg5[%c40_85, %c0_86] : memref<72x256xf32, #tpu.memory_space<vmem>>, vector<8x256xf32>
    tpu.vector_store %arg5[%c40_85, %c0_86], %153 {strides = array<i32>} : memref<72x256xf32, #tpu.memory_space<vmem>>, vector<8x256xf32>,
    %c0_87 = arith.constant 0 : index
    %c158 = arith.constant 158 : index
    %155 = vector.load %arg4[%c0_87, %c158] : memref<8x512xf32, #tpu.memory_space<vmem>>, vector<8x256xf32>
    %cst_88 = arith.constant 0.000000e+00 : f32
    %156 = vector.broadcast %cst_88 : f32 to vector<8x256xf32>
    %157 = vector.shape_cast %50 : vector<1x256xi1> to vector<1x256xi1>
    %158 = vector.broadcast %157 : vector<1x256xi1> to vector<8x256xi1>
    %159 = arith.select %158, %155, %156 : vector<8x256xi1>, vector<8x256xf32>
    %c48_89 = arith.constant 48 : index
    %c0_90 = arith.constant 0 : index
    %160 = vector.load %arg5[%c48_89, %c0_90] : memref<72x256xf32, #tpu.memory_space<vmem>>, vector<8x256xf32>
    tpu.vector_store %arg5[%c48_89, %c0_90], %159 {strides = array<i32>} : memref<72x256xf32, #tpu.memory_space<vmem>>, vector<8x256xf32>,
    %c0_91 = arith.constant 0 : index
    %c160 = arith.constant 160 : index
    %161 = vector.load %arg4[%c0_91, %c160] : memref<8x512xf32, #tpu.memory_space<vmem>>, vector<8x256xf32>
    %c56_92 = arith.constant 56 : index
    %c0_93 = arith.constant 0 : index
    %162 = vector.load %arg5[%c56_92, %c0_93] : memref<72x256xf32, #tpu.memory_space<vmem>>, vector<8x256xf32>
    tpu.vector_store %arg5[%c56_92, %c0_93], %161 {strides = array<i32>} : memref<72x256xf32, #tpu.memory_space<vmem>>, vector<8x256xf32>,
    %c0_94 = arith.constant 0 : index
    %c162 = arith.constant 162 : index
    %163 = vector.load %arg4[%c0_94, %c162] : memref<8x512xf32, #tpu.memory_space<vmem>>, vector<8x256xf32>
    %cst_95 = arith.constant 0.000000e+00 : f32
    %164 = vector.broadcast %cst_95 : f32 to vector<8x256xf32>
    %165 = vector.shape_cast %59 : vector<1x256xi1> to vector<1x256xi1>
    %166 = vector.broadcast %165 : vector<1x256xi1> to vector<8x256xi1>
    %167 = arith.select %166, %163, %164 : vector<8x256xi1>, vector<8x256xf32>
    %c64_96 = arith.constant 64 : index
    %c0_97 = arith.constant 0 : index
    %168 = vector.load %arg5[%c64_96, %c0_97] : memref<72x256xf32, #tpu.memory_space<vmem>>, vector<8x256xf32>
    tpu.vector_store %arg5[%c64_96, %c0_97], %167 {strides = array<i32>} : memref<72x256xf32, #tpu.memory_space<vmem>>, vector<8x256xf32>,
    %c1 = arith.constant 1 : index
    %c0_98 = arith.constant 0 : index
    %c0_99 = arith.constant 0 : index
    %169 = vector.load %arg2[%c1, %c0_98, %c0_99] : memref<3x4x72xf32, #tpu.memory_space<vmem>>, vector<1x4x72xf32>
    %170 = vector.shape_cast %169 : vector<1x4x72xf32> to vector<4x72xf32>
    %c0_100 = arith.constant 0 : index
    %c0_101 = arith.constant 0 : index
    %171 = vector.load %arg5[%c0_100, %c0_101] : memref<72x256xf32, #tpu.memory_space<vmem>>, vector<72x256xf32>
    %cst_102 = arith.constant dense<0.000000e+00> : vector<4x256xf32>
    %172 = tpu.matmul %170, %171, %cst_102 {dimension_numbers = #tpu.dot_dimension_numbers<[1], [0], [0], [1], [0, 0, 1, 1], [], []>} : vector<4x72xf32>, vector<72x256xf32>, vector<4x256xf32> -> vector<4x256xf32>
    %c0_103 = arith.constant 0 : index
    %c4 = arith.constant 4 : index
    %c0_104 = arith.constant 0 : index
    %173 = vector.load %arg3[%c0_103, %c4, %c0_104] : memref<1x12x256xf32, #tpu.memory_space<vmem>>, vector<1x4x256xf32>
    %174 = vector.shape_cast %173 : vector<1x4x256xf32> to vector<4x256xf32>
    %175 = vector.shape_cast %172 : vector<4x256xf32> to vector<1x4x256xf32>
    tpu.vector_store %arg3[%c0_103, %c4, %c0_104], %175 {strides = array<i32>} : memref<1x12x256xf32, #tpu.memory_space<vmem>>, vector<1x4x256xf32>,
    %c0_105 = arith.constant 0 : index
    %c43 = arith.constant 43 : index
    %176 = vector.load %arg4[%c0_105, %c43] : memref<8x512xf32, #tpu.memory_space<vmem>>, vector<8x256xf32>
    %cst_106 = arith.constant 0.000000e+00 : f32
    %177 = vector.broadcast %cst_106 : f32 to vector<8x256xf32>
    %178 = vector.shape_cast %68 : vector<1x256xi1> to vector<1x256xi1>
    %179 = vector.broadcast %178 : vector<1x256xi1> to vector<8x256xi1>
    %180 = arith.select %179, %176, %177 : vector<8x256xi1>, vector<8x256xf32>
    %c0_107 = arith.constant 0 : index
    %c0_108 = arith.constant 0 : index
    %181 = vector.load %arg5[%c0_107, %c0_108] : memref<72x256xf32, #tpu.memory_space<vmem>>, vector<8x256xf32>
    tpu.vector_store %arg5[%c0_107, %c0_108], %180 {strides = array<i32>} : memref<72x256xf32, #tpu.memory_space<vmem>>, vector<8x256xf32>,
    %c0_109 = arith.constant 0 : index
    %c48_110 = arith.constant 48 : index
    %182 = vector.load %arg4[%c0_109, %c48_110] : memref<8x512xf32, #tpu.memory_space<vmem>>, vector<8x256xf32>
    %c8_111 = arith.constant 8 : index
    %c0_112 = arith.constant 0 : index
    %183 = vector.load %arg5[%c8_111, %c0_112] : memref<72x256xf32, #tpu.memory_space<vmem>>, vector<8x256xf32>
    tpu.vector_store %arg5[%c8_111, %c0_112], %182 {strides = array<i32>} : memref<72x256xf32, #tpu.memory_space<vmem>>, vector<8x256xf32>,
    %c0_113 = arith.constant 0 : index
    %c53 = arith.constant 53 : index
    %184 = vector.load %arg4[%c0_113, %c53] : memref<8x512xf32, #tpu.memory_space<vmem>>, vector<8x256xf32>
    %cst_114 = arith.constant 0.000000e+00 : f32
    %185 = vector.broadcast %cst_114 : f32 to vector<8x256xf32>
    %186 = vector.shape_cast %77 : vector<1x256xi1> to vector<1x256xi1>
    %187 = vector.broadcast %186 : vector<1x256xi1> to vector<8x256xi1>
    %188 = arith.select %187, %184, %185 : vector<8x256xi1>, vector<8x256xf32>
    %c16_115 = arith.constant 16 : index
    %c0_116 = arith.constant 0 : index
    %189 = vector.load %arg5[%c16_115, %c0_116] : memref<72x256xf32, #tpu.memory_space<vmem>>, vector<8x256xf32>
    tpu.vector_store %arg5[%c16_115, %c0_116], %188 {strides = array<i32>} : memref<72x256xf32, #tpu.memory_space<vmem>>, vector<8x256xf32>,
    %c0_117 = arith.constant 0 : index
    %c123 = arith.constant 123 : index
    %190 = vector.load %arg4[%c0_117, %c123] : memref<8x512xf32, #tpu.memory_space<vmem>>, vector<8x256xf32>
    %cst_118 = arith.constant 0.000000e+00 : f32
    %191 = vector.broadcast %cst_118 : f32 to vector<8x256xf32>
    %192 = vector.shape_cast %68 : vector<1x256xi1> to vector<1x256xi1>
    %193 = vector.broadcast %192 : vector<1x256xi1> to vector<8x256xi1>
    %194 = arith.select %193, %190, %191 : vector<8x256xi1>, vector<8x256xf32>
    %c24_119 = arith.constant 24 : index
    %c0_120 = arith.constant 0 : index
    %195 = vector.load %arg5[%c24_119, %c0_120] : memref<72x256xf32, #tpu.memory_space<vmem>>, vector<8x256xf32>
    tpu.vector_store %arg5[%c24_119, %c0_120], %194 {strides = array<i32>} : memref<72x256xf32, #tpu.memory_space<vmem>>, vector<8x256xf32>,
    %c0_121 = arith.constant 0 : index
    %c128_122 = arith.constant 128 : index
    %196 = vector.load %arg4[%c0_121, %c128_122] : memref<8x512xf32, #tpu.memory_space<vmem>>, vector<8x256xf32>
    %c32_123 = arith.constant 32 : index
    %c0_124 = arith.constant 0 : index
    %197 = vector.load %arg5[%c32_123, %c0_124] : memref<72x256xf32, #tpu.memory_space<vmem>>, vector<8x256xf32>
    tpu.vector_store %arg5[%c32_123, %c0_124], %196 {strides = array<i32>} : memref<72x256xf32, #tpu.memory_space<vmem>>, vector<8x256xf32>,
    %c0_125 = arith.constant 0 : index
    %c133 = arith.constant 133 : index
    %198 = vector.load %arg4[%c0_125, %c133] : memref<8x512xf32, #tpu.memory_space<vmem>>, vector<8x256xf32>
    %cst_126 = arith.constant 0.000000e+00 : f32
    %199 = vector.broadcast %cst_126 : f32 to vector<8x256xf32>
    %200 = vector.shape_cast %77 : vector<1x256xi1> to vector<1x256xi1>
    %201 = vector.broadcast %200 : vector<1x256xi1> to vector<8x256xi1>
    %202 = arith.select %201, %198, %199 : vector<8x256xi1>, vector<8x256xf32>
    %c40_127 = arith.constant 40 : index
    %c0_128 = arith.constant 0 : index
    %203 = vector.load %arg5[%c40_127, %c0_128] : memref<72x256xf32, #tpu.memory_space<vmem>>, vector<8x256xf32>
    tpu.vector_store %arg5[%c40_127, %c0_128], %202 {strides = array<i32>} : memref<72x256xf32, #tpu.memory_space<vmem>>, vector<8x256xf32>,
    %c0_129 = arith.constant 0 : index
    %c203 = arith.constant 203 : index
    %204 = vector.load %arg4[%c0_129, %c203] : memref<8x512xf32, #tpu.memory_space<vmem>>, vector<8x256xf32>
    %cst_130 = arith.constant 0.000000e+00 : f32
    %205 = vector.broadcast %cst_130 : f32 to vector<8x256xf32>
    %206 = vector.shape_cast %68 : vector<1x256xi1> to vector<1x256xi1>
    %207 = vector.broadcast %206 : vector<1x256xi1> to vector<8x256xi1>
    %208 = arith.select %207, %204, %205 : vector<8x256xi1>, vector<8x256xf32>
    %c48_131 = arith.constant 48 : index
    %c0_132 = arith.constant 0 : index
    %209 = vector.load %arg5[%c48_131, %c0_132] : memref<72x256xf32, #tpu.memory_space<vmem>>, vector<8x256xf32>
    tpu.vector_store %arg5[%c48_131, %c0_132], %208 {strides = array<i32>} : memref<72x256xf32, #tpu.memory_space<vmem>>, vector<8x256xf32>,
    %c0_133 = arith.constant 0 : index
    %c208 = arith.constant 208 : index
    %210 = vector.load %arg4[%c0_133, %c208] : memref<8x512xf32, #tpu.memory_space<vmem>>, vector<8x256xf32>
    %c56_134 = arith.constant 56 : index
    %c0_135 = arith.constant 0 : index
    %211 = vector.load %arg5[%c56_134, %c0_135] : memref<72x256xf32, #tpu.memory_space<vmem>>, vector<8x256xf32>
    tpu.vector_store %arg5[%c56_134, %c0_135], %210 {strides = array<i32>} : memref<72x256xf32, #tpu.memory_space<vmem>>, vector<8x256xf32>,
    %c0_136 = arith.constant 0 : index
    %c213 = arith.constant 213 : index
    %212 = vector.load %arg4[%c0_136, %c213] : memref<8x512xf32, #tpu.memory_space<vmem>>, vector<8x256xf32>
    %cst_137 = arith.constant 0.000000e+00 : f32
    %213 = vector.broadcast %cst_137 : f32 to vector<8x256xf32>
    %214 = vector.shape_cast %77 : vector<1x256xi1> to vector<1x256xi1>
    %215 = vector.broadcast %214 : vector<1x256xi1> to vector<8x256xi1>
    %216 = arith.select %215, %212, %213 : vector<8x256xi1>, vector<8x256xf32>
    %c64_138 = arith.constant 64 : index
    %c0_139 = arith.constant 0 : index
    %217 = vector.load %arg5[%c64_138, %c0_139] : memref<72x256xf32, #tpu.memory_space<vmem>>, vector<8x256xf32>
    tpu.vector_store %arg5[%c64_138, %c0_139], %216 {strides = array<i32>} : memref<72x256xf32, #tpu.memory_space<vmem>>, vector<8x256xf32>,
    %c2 = arith.constant 2 : index
    %c0_140 = arith.constant 0 : index
    %c0_141 = arith.constant 0 : index
    %218 = vector.load %arg2[%c2, %c0_140, %c0_141] : memref<3x4x72xf32, #tpu.memory_space<vmem>>, vector<1x4x72xf32>
    %219 = vector.shape_cast %218 : vector<1x4x72xf32> to vector<4x72xf32>
    %c0_142 = arith.constant 0 : index
    %c0_143 = arith.constant 0 : index
    %220 = vector.load %arg5[%c0_142, %c0_143] : memref<72x256xf32, #tpu.memory_space<vmem>>, vector<72x256xf32>
    %cst_144 = arith.constant dense<0.000000e+00> : vector<4x256xf32>
    %221 = tpu.matmul %219, %220, %cst_144 {dimension_numbers = #tpu.dot_dimension_numbers<[1], [0], [0], [1], [0, 0, 1, 1], [], []>} : vector<4x72xf32>, vector<72x256xf32>, vector<4x256xf32> -> vector<4x256xf32>
    %c0_145 = arith.constant 0 : index
    %c8_146 = arith.constant 8 : index
    %c0_147 = arith.constant 0 : index
    %222 = vector.load %arg3[%c0_145, %c8_146, %c0_147] : memref<1x12x256xf32, #tpu.memory_space<vmem>>, vector<1x4x256xf32>
    %223 = vector.shape_cast %222 : vector<1x4x256xf32> to vector<4x256xf32>
    %224 = vector.shape_cast %221 : vector<4x256xf32> to vector<1x4x256xf32>
    tpu.vector_store %arg3[%c0_145, %c8_146, %c0_147], %224 {strides = array<i32>} : memref<1x12x256xf32, #tpu.memory_space<vmem>>, vector<1x4x256xf32>,
    return
  }
  func.func @transform_0(%arg0: i32) -> (i32, i32, i32) {
    %c0_i32 = arith.constant 0 : i32
    %c0_i32_0 = arith.constant 0 : i32
    %c0_i32_1 = arith.constant 0 : i32
    return %arg0, %c0_i32, %c0_i32_0 : i32, i32, i32
  }
  func.func @transform_1(%arg0: i32) -> (i32, i32, i32) {
    %c0_i32 = arith.constant 0 : i32
    %c0_i32_0 = arith.constant 0 : i32
    %c0_i32_1 = arith.constant 0 : i32
    %c0_i32_2 = arith.constant 0 : i32
    return %c0_i32, %c0_i32_0, %c0_i32_1 : i32, i32, i32
  }
  func.func @transform_2(%arg0: i32) -> (i32, i32, i32) {
    %c0_i32 = arith.constant 0 : i32
    %c0_i32_0 = arith.constant 0 : i32
    %c0_i32_1 = arith.constant 0 : i32
    return %arg0, %c0_i32, %c0_i32_0 : i32, i32, i32
  }
}

</mosaic_0001>

<llo_original>
// kernel: tpu_custom_call.1
$region0: #{tpu_custom_call.1}
  #allocation0 [shape = 'u32[]', space=smem, size = 0x4, offset = 0x4, fixed_abs, tag = 'smem constant byte address 0x4 - core index']
  #allocation1 [shape = 'u32[144,128]{1,0:T(1,128)}', space=vmem, size = 0x12000, scoped, tag = 'internal scratch']
  #allocation2 [shape = 'f32[8,512]{1,0:T(8,128)}', space=vmem, size = 0x4000, scoped, tag = 'scratch operand']
  #allocation3 [shape = 'f32[72,256]{1,0:T(8,128)}', space=vmem, size = 0x12000, scoped, tag = 'scratch operand']
  %s0 = inlined_call_operand.hbm [shape: f32[2,8,256], index: 0, kind: input, shape index: {}]
  %s1 = inlined_call_operand.hbm [shape: f32[3,4,72], index: 1, kind: input, shape index: {}]
  %s2 = inlined_call_operand.vmem [shape: f32[2,12,256], index: 2, kind: output, shape index: {}]
  %s3 = sld [smem:[#allocation0]]
  $region49: #{tpu_custom_call.1} parent=0
    _
  %s5 = ssub.s32 1, %s3
  %s6 = scalar_select 0, %s5, %s3
  $region1: #{tpu_custom_call.1} parent=0
    #allocation4 [shape = 'u8[16384]{0}', space=vmem, size = 0x4000, scoped, tag = 'input window, operand 0']
    #allocation5 [shape = 's32[2]{0}', space=sflag, size = 0x8, scoped, tag = 'scoped memory for tpu_custom_call.1']
    #allocation6 [shape = 'u8[6144]{0}', space=vmem, size = 0x1800, scoped, tag = 'input window, operand 1, single buffered']
    #allocation7 [shape = 's32[1]{0}', space=sflag, size = 0x4, scoped, tag = 'scoped memory for tpu_custom_call.1']
    %7 = vsyncpa [#allocation5], 0
    %s8 = scalar_lea.sflag [#allocation5], 1
    %9 = vsyncpa %s8, 0
    %10 = vsyncpa [#allocation7], 0
    loop: start=0, step=1, limit=4
    $region2: #{tpu_custom_call.1} parent=1 // loop_pre_header
      _
    $region3: #{tpu_custom_call.1} parent=1 // loop_header
      %s12 = sphi 0, %s16
      %p13 = scmp.ge.s32.totalorder %s12, 4
      %s22 = sphi 0, %s24
      %s25 = sphi 0, %s22
      %s26 = sphi 0, %s25
      %s42 = sphi 0, %s26
      %s46 = sphi 0, %s46
      %s48 = sphi 0, %s46
      %s49 = sphi 0, %s48
      %s63 = sphi 0, %s49
      %s69 = sphi 0, %s71
      %s72 = sphi 0, %s69
      %s73 = sphi 0, %s72
      %s89 = sphi 0, %s73
    $region4: #{tpu_custom_call.1} parent=1 // loop_header_branch
      %15 = sbr.rel (%p13) target = $region8
    $region5: #{tpu_custom_call.1} parent=1 // loop_body
      %s17 = ssub.s32 %s12, 1
      %s18 = ssub.s32 %s12, 2
      %s19 = sadd.s32 %s12, 1
      %s20 = ssub.s32 %s12, %s19
      %p21 = scmp.eq.s32.totalorder %s20, 0
      %s23 = sadd.s32 %s22, 1
      %s24 = scalar_select %p21, %s22, %s23
      %p27 = pneg %p21
      %p28 = scmp.eq.s32.totalorder %s12, 1
      %p29 = por %p27, %p28
      %p30 = scmp.ne.s32.totalorder %s22, %s25
      %p31 = scmp.eq.s32.totalorder %s12, 0
      %p32 = por %p30, %p31
      %p33 = scmp.ne.s32.totalorder %s22, %s25
      %p34 = scmp.eq.s32.totalorder %s17, 1
      %p35 = por %p33, %p34
      %p36 = scmp.ne.s32.totalorder %s25, %s26
      %p37 = scmp.eq.s32.totalorder %s17, 0
      %p38 = por %p36, %p37
      %p39 = scmp.ne.s32.totalorder %s25, %s26
      %p40 = scmp.eq.s32.totalorder %s18, 1
      %p41 = por %p39, %p40
      %p43 = scmp.ne.s32.totalorder %s26, %s42
      %p44 = scmp.eq.s32.totalorder %s18, 0
      %p45 = por %p43, %p44
      %s47 = sadd.s32 %s46, 1
      %p50 = scmp.eq.s32.totalorder %s12, 1
      %p51 = scmp.ne.s32.totalorder %s46, %s48
      %p52 = scmp.eq.s32.totalorder %s12, 0
      %p53 = por %p51, %p52
      %p54 = scmp.ne.s32.totalorder %s46, %s48
      %p55 = scmp.eq.s32.totalorder %s17, 1
      %p56 = por %p54, %p55
      %p57 = scmp.ne.s32.totalorder %s48, %s49
      %p58 = scmp.eq.s32.totalorder %s17, 0
      %p59 = por %p57, %p58
      %p60 = scmp.ne.s32.totalorder %s48, %s49
      %p61 = scmp.eq.s32.totalorder %s18, 1
      %p62 = por %p60, %p61
      %p64 = scmp.ne.s32.totalorder %s49, %s63
      %p65 = scmp.eq.s32.totalorder %s18, 0
      %p66 = por %p64, %p65
      %s67 = ssub.s32 %s12, %s19
      %p68 = scmp.eq.s32.totalorder %s67, 0
      %s70 = sadd.s32 %s69, 1
      %s71 = scalar_select %p68, %s69, %s70
      %p74 = pneg %p68
      %p75 = scmp.eq.s32.totalorder %s12, 1
      %p76 = por %p74, %p75
      %p77 = scmp.ne.s32.totalorder %s69, %s72
      %p78 = scmp.eq.s32.totalorder %s12, 0
      %p79 = por %p77, %p78
      %p80 = scmp.ne.s32.totalorder %s69, %s72
      %p81 = scmp.eq.s32.totalorder %s17, 1
      %p82 = por %p80, %p81
      %p83 = scmp.ne.s32.totalorder %s72, %s73
      %p84 = scmp.eq.s32.totalorder %s17, 0
      %p85 = por %p83, %p84
      %p86 = scmp.ne.s32.totalorder %s72, %s73
      %p87 = scmp.eq.s32.totalorder %s18, 1
      %p88 = por %p86, %p87
      %p90 = scmp.ne.s32.totalorder %s73, %s89
      %p91 = scmp.eq.s32.totalorder %s18, 0
      %p92 = por %p90, %p91
      %p93 = scmp.le.s32.totalorder 1, %s12
      %p94 = scmp.lt.s32.totalorder %s12, 3
      %p95 = pnand %p93, %p94
      %p96 = pneg %p95
      // Predicated region
      $region9: #{tpu_custom_call.1} parent=5 // pred_check
        _
      $region10: #{tpu_custom_call.1} parent=5 // pred_check_branch
        %98 = sbr.rel (%p95) target = $region12
      $region11: #{tpu_custom_call.1} parent=5 // pred_region
        %s99 = ssub.s32 %s12, 1
        // Predicated region
        $region13: #{tpu_custom_call.1} parent=11 // pred_check
          %p100 = pneg %p59
        $region14: #{tpu_custom_call.1} parent=11 // pred_check_branch
          %102 = sbr.rel (%p100) target = $region16
        $region15: #{tpu_custom_call.1} parent=11 // pred_region
          %s104 = ssub.s32 192, 192
          %105 = vsyncadd [#allocation7], %s104
          %s106 = sshll.u32 [#allocation6], 4
          %s107 = int_to_ptr.vmem [resolvable:$true] %s106
          %112 = dma.hbm_to_vmem [thread:$0]  %s1, 192, %s107, [#allocation7], 64, 64, 4
        $region16: #{tpu_custom_call.1} parent=11 // pred_fallthru
          _
      $region12: #{tpu_custom_call.1} parent=5 // pred_fallthru
        _
      %p113 = scmp.lt.s32.totalorder %s12, 2
      // Predicated region
      $region17: #{tpu_custom_call.1} parent=5 // pred_check
        %p114 = pneg %p113
      $region18: #{tpu_custom_call.1} parent=5 // pred_check_branch
        %116 = sbr.rel (%p114) target = $region20
      $region19: #{tpu_custom_call.1} parent=5 // pred_region
        // Predicated region
        $region21: #{tpu_custom_call.1} parent=19 // pred_check
          %p117 = pneg %p32
        $region22: #{tpu_custom_call.1} parent=19 // pred_check_branch
          %119 = sbr.rel (%p117) target = $region24
        $region23: #{tpu_custom_call.1} parent=19 // pred_region
          %s120 = sand.u32 %s22, 1
          %s121 = scalar_lea.sflag [#allocation5], %s120
          %s122 = sand.u32 %s22, 1
          %s123 = smul.addr %s122, 16
          %s124 = scalar_lea.vmem [#allocation4], %s123
          %s126 = ssub.s32 256, 256
          %127 = vsyncadd %s121, %s126
          %s128 = smul.addr %s12, 2
          %s129 = smul.addr %s128, 128
          %s130 = scalar_lea.hbm %s0, %s129
          %s132 = sshll.u32 %s124, 4
          %s133 = int_to_ptr.vmem [resolvable:$true] %s132
          %135 = dma.hbm_to_vmem [thread:$0]  %s130, 256, %s133, %s121
        $region24: #{tpu_custom_call.1} parent=19 // pred_fallthru
          _
      $region20: #{tpu_custom_call.1} parent=5 // pred_fallthru
        _
      %p136 = scmp.le.s32.totalorder 1, %s12
      %p137 = scmp.lt.s32.totalorder %s12, 3
      %p138 = pnand %p136, %p137
      %p139 = pneg %p138
      // Predicated region
      $region25: #{tpu_custom_call.1} parent=5 // pred_check
        _
      $region26: #{tpu_custom_call.1} parent=5 // pred_check_branch
        %141 = sbr.rel (%p138) target = $region28
      $region27: #{tpu_custom_call.1} parent=5 // pred_region
        %s142 = ssub.s32 %s12, 1
        %s143 = sand.u32 %s25, 1
        %s144 = scalar_lea.sflag [#allocation5], %s143
        %s145 = sand.u32 %s25, 1
        %s146 = smul.addr %s145, 16
        %s147 = scalar_lea.vmem [#allocation4], %s146
        // Predicated region
        $region29: #{tpu_custom_call.1} parent=27 // pred_check
          %p148 = pneg %p38
        $region30: #{tpu_custom_call.1} parent=27 // pred_check_branch
          %150 = sbr.rel (%p148) target = $region32
        $region31: #{tpu_custom_call.1} parent=27 // pred_region
          %151 = dma.done %s144, 256
        $region32: #{tpu_custom_call.1} parent=27 // pred_fallthru
          _
        // Predicated region
        $region33: #{tpu_custom_call.1} parent=27 // pred_check
          %p152 = pneg %p59
        $region34: #{tpu_custom_call.1} parent=27 // pred_check_branch
          %154 = sbr.rel (%p152) target = $region36
        $region35: #{tpu_custom_call.1} parent=27 // pred_region
          %155 = dma.done [#allocation7], 192
        $region36: #{tpu_custom_call.1} parent=27 // pred_fallthru
          _
        %s156 = sand.u32 %s25, 1
        %s157 = scalar_lea.sflag [#allocation5], %s156
        %s158 = sand.u32 %s25, 1
        %s159 = smul.addr %s158, 16
        %s160 = scalar_lea.vmem [#allocation4], %s159
        %p161 = pneg %p38
        %p162 = pneg %p35
        %p163 = pneg %p59
        %p164 = pneg %p56
        %p165 = pneg %p85
        %p166 = pneg %p82
        %p167 = scmp.lt.s32.totalorder %s17, 1
        %s168 = scalar_select %p167, %s17, 1
        %s169 = smul.addr %s168, 4
        %s170 = smul.addr %s169, 8
        %s171 = scalar_lea.vmem %s2, %s170
        %p172 = scmp.lt.s32.totalorder %s17, 1
        %s173 = scalar_select %p172, %s17, 1
        %s174 = smul.addr %s173, 4
        %s175 = smul.addr %s174, 8
        %s176 = scalar_lea.vmem %s2, %s175
        %177 = vst [vmem:[#allocation2] sm:$0xff] 0.0
        %178 = vst [vmem:[#allocation2 + $0x18] sm:$0xff] 0.0
        %v179 = vld [vmem:[%s147] sm:$0xff]
        %v180 = vld [vmem:[%s147 + $0x8] sm:$0xff]
        %181 = vst [vmem:[#allocation2 + $0x8] sm:$0xff] %v179
        %182 = vst [vmem:[#allocation2 + $0x10] sm:$0xff] %v180
        %v183 = vlaneseq
        %v184 = vand.u32 %v183, 127
        %v185 = vadd.s32 %v184, 128
        %vm186 = vcmp.lt.s32.totalorder %v184, 0
        %v187 = vsub.s32 0, %v184
        %v188 = vsel %vm186, %v187, %v184
        %v189 = vshrl.u32 %v188, 4
        %v190 = vand.u32 %v188, 15
        %v191 = vsub.s32 0, %v190
        %v192 = vsel %vm186, %v191, %v190
        %vm193 = vcmp.lt.s32.totalorder %v185, 0
        %v194 = vsub.s32 0, %v185
        %v195 = vsel %vm193, %v194, %v185
        %v196 = vshrl.u32 %v195, 4
        %v197 = vand.u32 %v195, 15
        %v198 = vsub.s32 0, %v197
        %v199 = vsel %vm193, %v198, %v197
        %vm200 = vcmp.ne.s32.totalorder %v192, 0
        %vm201 = vcmp.ne.s32.totalorder %v199, 0
        %vm202 = vcmp.lt.s32.totalorder %v192, 0
        %vm203 = vcmp.lt.s32.totalorder %v199, 0
        %vm204 = vmand %vm202, %vm200
        %vm205 = vmand %vm203, %vm201
        %v206 = vadd.s32 %v192, 16
        %v207 = vadd.s32 %v199, 16
        %v208 = vsel %vm204, %v206, %v192
        %v209 = vsel %vm205, %v207, %v199
        %v210 = vadd.s32 %v208, 4294967295
        %v211 = vadd.s32 %v209, 4294967295
        %vm212 = vcmp.ge.s32.totalorder %v210, 0
        %vm213 = vcmp.ge.s32.totalorder %v211, 0
        %vm214 = vcmp.lt.s32.totalorder %v210, 16
        %vm215 = vcmp.lt.s32.totalorder %v211, 16
        %vm216 = vmand %vm212, %vm214
        %vm217 = vmand %vm213, %vm215
        %v218 = vadd.s32 %v208, 1
        %v219 = vadd.s32 %v209, 1
        %vm220 = vcmp.ge.s32.totalorder %v218, 0
        %vm221 = vcmp.ge.s32.totalorder %v219, 0
        %vm222 = vcmp.lt.s32.totalorder %v218, 16
        %vm223 = vcmp.lt.s32.totalorder %v219, 16
        %vm224 = vmand %vm220, %vm222
        %vm225 = vmand %vm221, %vm223
        %v226 = vadd.s32 %v208, 4294967294
        %v227 = vadd.s32 %v209, 4294967294
        %vm228 = vcmp.ge.s32.totalorder %v226, 0
        %vm229 = vcmp.ge.s32.totalorder %v227, 0
        %vm230 = vcmp.lt.s32.totalorder %v226, 16
        %vm231 = vcmp.lt.s32.totalorder %v227, 16
        %vm232 = vmand %vm228, %vm230
        %vm233 = vmand %vm229, %vm231
        %v234 = vadd.s32 %v208, 2
        %v235 = vadd.s32 %v209, 2
        %vm236 = vcmp.ge.s32.totalorder %v234, 0
        %vm237 = vcmp.ge.s32.totalorder %v235, 0
        %vm238 = vcmp.lt.s32.totalorder %v234, 16
        %vm239 = vcmp.lt.s32.totalorder %v235, 16
        %vm240 = vmand %vm236, %vm238
        %vm241 = vmand %vm237, %vm239
        %v242 = vadd.s32 %v208, 4294967291
        %v243 = vadd.s32 %v209, 4294967291
        %vm244 = vcmp.ge.s32.totalorder %v242, 0
        %vm245 = vcmp.ge.s32.totalorder %v243, 0
        %vm246 = vcmp.lt.s32.totalorder %v242, 16
        %vm247 = vcmp.lt.s32.totalorder %v243, 16
        %vm248 = vmand %vm244, %vm246
        %vm249 = vmand %vm245, %vm247
        %v250 = vadd.s32 %v208, 5
        %v251 = vadd.s32 %v209, 5
        %vm252 = vcmp.ge.s32.totalorder %v250, 0
        %vm253 = vcmp.ge.s32.totalorder %v251, 0
        %vm254 = vcmp.lt.s32.totalorder %v250, 16
        %vm255 = vcmp.lt.s32.totalorder %v251, 16
        %vm256 = vmand %vm252, %vm254
        %vm257 = vmand %vm253, %vm255
        %v258 = vld [vmem:[#allocation2] sm:$0xff]
        %v259 = vld [vmem:[#allocation2 + $0x8] sm:$0xff]
        %v260 = vld [vmem:[#allocation2 + $0x10] sm:$0xff]
        %v261 = vsel %vm216, 1, 0
        %v262 = vsel %vm217, 1, 0
        %vm263 = vcmp.eq.s32.totalorder %v261, 1
        %vm264 = vcmp.eq.s32.totalorder %v262, 1
        %268 = vrot.lane.b32.xlu0 %v258, 17
        %v269 = vpop.permute.xlu0 %268
        %270 = vrot.lane.b32.xlu0 %v259, 17
        %v271 = vpop.permute.xlu0 %270
        %272 = vrot.lane.b32.xlu0 %v260, 17
        %v273 = vpop.permute.xlu0 %272
        %vm274 = vcmask 138240
        %v275 = vsel %vm274, %v269, %v271
        %v276 = vsel %vm274, %v271, %v273
        %v279 = vsel %vm263, %v275, 0.0
        %v280 = vsel %vm264, %v276, 0.0
        %281 = vst [vmem:[#allocation3] sm:$0xff] %v279
        %282 = vst [vmem:[#allocation3 + $0x8] sm:$0xff] %v280
        %v283 = vld [vmem:[#allocation2] sm:$0xff]
        %v284 = vld [vmem:[#allocation2 + $0x8] sm:$0xff]
        %v285 = vld [vmem:[#allocation2 + $0x10] sm:$0xff]
        %289 = vrot.lane.b32.xlu0 %v283, 16
        %v290 = vpop.permute.xlu0 %289
        %291 = vrot.lane.b32.xlu0 %v284, 16
        %v292 = vpop.permute.xlu0 %291
        %293 = vrot.lane.b32.xlu0 %v285, 16
        %v294 = vpop.permute.xlu0 %293
        %vm295 = vcmask 130048
        %v296 = vsel %vm295, %v290, %v292
        %v297 = vsel %vm295, %v292, %v294
        %300 = vst [vmem:[#allocation3 + $0x10] sm:$0xff] %v296
        %301 = vst [vmem:[#allocation3 + $0x18] sm:$0xff] %v297
        %v302 = vld [vmem:[#allocation2] sm:$0xff]
        %v303 = vld [vmem:[#allocation2 + $0x8] sm:$0xff]
        %v304 = vld [vmem:[#allocation2 + $0x10] sm:$0xff]
        %v305 = vsel %vm224, 1, 0
        %v306 = vsel %vm225, 1, 0
        %vm307 = vcmp.eq.s32.totalorder %v305, 1
        %vm308 = vcmp.eq.s32.totalorder %v306, 1
        %312 = vrot.lane.b32.xlu0 %v302, 15
        %v313 = vpop.permute.xlu0 %312
        %314 = vrot.lane.b32.xlu0 %v303, 15
        %v315 = vpop.permute.xlu0 %314
        %316 = vrot.lane.b32.xlu0 %v304, 15
        %v317 = vpop.permute.xlu0 %316
        %vm318 = vcmask 121856
        %v319 = vsel %vm318, %v313, %v315
        %v320 = vsel %vm318, %v315, %v317
        %v323 = vsel %vm307, %v319, 0.0
        %v324 = vsel %vm308, %v320, 0.0
        %325 = vst [vmem:[#allocation3 + $0x20] sm:$0xff] %v323
        %326 = vst [vmem:[#allocation3 + $0x28] sm:$0xff] %v324
        %v327 = vld [vmem:[#allocation2] sm:$0xff]
        %v328 = vld [vmem:[#allocation2 + $0x8] sm:$0xff]
        %v329 = vld [vmem:[#allocation2 + $0x10] sm:$0xff]
        %333 = vrot.lane.b32.xlu0 %v327, 1
        %v334 = vpop.permute.xlu0 %333
        %335 = vrot.lane.b32.xlu0 %v328, 1
        %v336 = vpop.permute.xlu0 %335
        %337 = vrot.lane.b32.xlu0 %v329, 1
        %v338 = vpop.permute.xlu0 %337
        %vm339 = vcmask 7168
        %v340 = vsel %vm339, %v334, %v336
        %v341 = vsel %vm339, %v336, %v338
        %v344 = vsel %vm263, %v340, 0.0
        %v345 = vsel %vm264, %v341, 0.0
        %346 = vst [vmem:[#allocation3 + $0x30] sm:$0xff] %v344
        %347 = vst [vmem:[#allocation3 + $0x38] sm:$0xff] %v345
        %v348 = vld [vmem:[#allocation2 + $0x8] sm:$0xff]
        %v349 = vld [vmem:[#allocation2 + $0x10] sm:$0xff]
        %350 = vst [vmem:[#allocation3 + $0x40] sm:$0xff] %v348
        %351 = vst [vmem:[#allocation3 + $0x48] sm:$0xff] %v349
        %v352 = vld [vmem:[#allocation2 + $0x8] sm:$0xff]
        %v353 = vld [vmem:[#allocation2 + $0x10] sm:$0xff]
        %v354 = vld [vmem:[#allocation2 + $0x18] sm:$0xff]
        %358 = vrot.lane.b32.xlu0 %v352, 127
        %v359 = vpop.permute.xlu0 %358
        %360 = vrot.lane.b32.xlu0 %v353, 127
        %v361 = vpop.permute.xlu0 %360
        %362 = vrot.lane.b32.xlu0 %v354, 127
        %v363 = vpop.permute.xlu0 %362
        %vm364 = vcmask 1039360
        %v365 = vsel %vm364, %v359, %v361
        %v366 = vsel %vm364, %v361, %v363
        %v369 = vsel %vm307, %v365, 0.0
        %v370 = vsel %vm308, %v366, 0.0
        %371 = vst [vmem:[#allocation3 + $0x50] sm:$0xff] %v369
        %372 = vst [vmem:[#allocation3 + $0x58] sm:$0xff] %v370
        %v373 = vld [vmem:[#allocation2 + $0x8] sm:$0xff]
        %v374 = vld [vmem:[#allocation2 + $0x10] sm:$0xff]
        %v375 = vld [vmem:[#allocation2 + $0x18] sm:$0xff]
        %379 = vrot.lane.b32.xlu0 %v373, 113
        %v380 = vpop.permute.xlu0 %379
        %381 = vrot.lane.b32.xlu0 %v374, 113
        %v382 = vpop.permute.xlu0 %381
        %383 = vrot.lane.b32.xlu0 %v375, 113
        %v384 = vpop.permute.xlu0 %383
        %vm385 = vcmask 924672
        %v386 = vsel %vm385, %v380, %v382
        %v387 = vsel %vm385, %v382, %v384
        %v390 = vsel %vm263, %v386, 0.0
        %v391 = vsel %vm264, %v387, 0.0
        %392 = vst [vmem:[#allocation3 + $0x60] sm:$0xff] %v390
        %393 = vst [vmem:[#allocation3 + $0x68] sm:$0xff] %v391
        %v394 = vld [vmem:[#allocation2 + $0x8] sm:$0xff]
        %v395 = vld [vmem:[#allocation2 + $0x10] sm:$0xff]
        %v396 = vld [vmem:[#allocation2 + $0x18] sm:$0xff]
        %400 = vrot.lane.b32.xlu0 %v394, 112
        %v401 = vpop.permute.xlu0 %400
        %402 = vrot.lane.b32.xlu0 %v395, 112
        %v403 = vpop.permute.xlu0 %402
        %404 = vrot.lane.b32.xlu0 %v396, 112
        %v405 = vpop.permute.xlu0 %404
        %vm406 = vcmask 916480
        %v407 = vsel %vm406, %v401, %v403
        %v408 = vsel %vm406, %v403, %v405
        %411 = vst [vmem:[#allocation3 + $0x70] sm:$0xff] %v407
        %412 = vst [vmem:[#allocation3 + $0x78] sm:$0xff] %v408
        %v413 = vld [vmem:[#allocation2 + $0x8] sm:$0xff]
        %v414 = vld [vmem:[#allocation2 + $0x10] sm:$0xff]
        %v415 = vld [vmem:[#allocation2 + $0x18] sm:$0xff]
        %419 = vrot.lane.b32.xlu0 %v413, 111
        %v420 = vpop.permute.xlu0 %419
        %421 = vrot.lane.b32.xlu0 %v414, 111
        %v422 = vpop.permute.xlu0 %421
        %423 = vrot.lane.b32.xlu0 %v415, 111
        %v424 = vpop.permute.xlu0 %423
        %vm425 = vcmask 908288
        %v426 = vsel %vm425, %v420, %v422
        %v427 = vsel %vm425, %v422, %v424
        %v430 = vsel %vm307, %v426, 0.0
        %v431 = vsel %vm308, %v427, 0.0
        %432 = vst [vmem:[#allocation3 + $0x80] sm:$0xff] %v430
        %433 = vst [vmem:[#allocation3 + $0x88] sm:$0xff] %v431
        %v434 = vld [vmem:[#allocation6] sm:$0xf]
        %v435 = vld [vmem:[#allocation3] sm:$0xff]
        %v436 = vld [vmem:[#allocation3 + $0x8] sm:$0xff]
        %v437 = vld [vmem:[#allocation3 + $0x10] sm:$0xff]
        %v438 = vld [vmem:[#allocation3 + $0x18] sm:$0xff]
        %v439 = vld [vmem:[#allocation3 + $0x20] sm:$0xff]
        %v440 = vld [vmem:[#allocation3 + $0x28] sm:$0xff]
        %v441 = vld [vmem:[#allocation3 + $0x30] sm:$0xff]
        %v442 = vld [vmem:[#allocation3 + $0x38] sm:$0xff]
        %v443 = vld [vmem:[#allocation3 + $0x40] sm:$0xff]
        %v444 = vld [vmem:[#allocation3 + $0x48] sm:$0xff]
        %v445 = vld [vmem:[#allocation3 + $0x50] sm:$0xff]
        %v446 = vld [vmem:[#allocation3 + $0x58] sm:$0xff]
        %v447 = vld [vmem:[#allocation3 + $0x60] sm:$0xff]
        %v448 = vld [vmem:[#allocation3 + $0x68] sm:$0xff]
        %v449 = vld [vmem:[#allocation3 + $0x70] sm:$0xff]
        %v450 = vld [vmem:[#allocation3 + $0x78] sm:$0xff]
        %v451 = vld [vmem:[#allocation3 + $0x80] sm:$0xff]
        %v452 = vld [vmem:[#allocation3 + $0x88] sm:$0xff]
        %vm453 = vcmask 588800
        %v455 = vsel %vm453, %v434, 0
        %457 = vmatprep.subr.mxu0 %v436
        %458 = vmatpush1.msra.mxu0 %v435
        %459 = vmatprep.subr.mxu0 %v438
        %460 = vmatpush1.msra.mxu0 %v437
        %461 = vmatprep.subr.mxu0 %v440
        %462 = vmatpush1.msra.mxu0 %v439
        %463 = vmatprep.subr.mxu0 %v442
        %464 = vmatpush1.msra.mxu0 %v441
        %465 = vmatprep.subr.mxu0 %v444
        %466 = vmatpush1.msra.mxu0 %v443
        %467 = vmatprep.subr.mxu0 %v446
        %468 = vmatpush1.msra.mxu0 %v445
        %469 = vmatprep.subr.mxu0 %v448
        %470 = vmatpush1.msra.mxu0 %v447
        %471 = vmatprep.subr.mxu0 %v450
        %472 = vmatpush1.msra.mxu0 %v449
        %473 = vmatprep.subr.mxu0 %v452
        %474 = vmatpush1.msra.mxu0 %v451
        %475 = vmatprep.subr.mxu0 0.0
        %476 = vmatpush1.msra.mxu0 0.0
        %477 = vmatprep.subr.mxu0 0.0
        %478 = vmatpush1.msra.mxu0 0.0
        %479 = vmatprep.subr.mxu0 0.0
        %480 = vmatpush1.msra.mxu0 0.0
        %481 = vmatprep.subr.mxu0 0.0
        %482 = vmatpush1.msra.mxu0 0.0
        %483 = vmatprep.subr.mxu0 0.0
        %484 = vmatpush1.msra.mxu0 0.0
        %485 = vmatprep.subr.mxu0 0.0
        %486 = vmatpush1.msra.mxu0 0.0
        %487 = vmatprep.subr.mxu0 0.0
        %488 = vmatpush1.msra.mxu0 0.0
        %489 = vmatprep.subr.mxu0 0.0
        %490 = vmatpush1.msra.mxu0 0.0
        %491 = vmatprep.subr.mxu0 0.0
        %492 = vmatpush1.msra.mxu0 0.0
        %493 = vmatprep.subr.mxu0 0.0
        %494 = vmatpush1.msra.mxu0 0.0
        %495 = vmatprep.subr.mxu0 0.0
        %496 = vmatpush1.msra.mxu0 0.0
        %497 = vmatprep.subr.mxu0 0.0
        %498 = vmatpush1.msra.mxu0 0.0
        %499 = vmatprep.subr.mxu0 0.0
        %500 = vmatpush1.msra.mxu0 0.0
        %501 = vmatprep.subr.mxu0 0.0
        %502 = vmatpush1.msra.mxu0 0.0
        %503 = vmatprep.subr.mxu0 0.0
        %504 = vmatpush1.msra.mxu0 0.0
        %505 = vmatprep.subr.mxu0 0.0
        %506 = vmatpush1.msra.mxu0 0.0
        %507 = vmatprep.subr.mxu0 0.0
        %508 = vmatpush1.msra.mxu0 0.0
        %509 = vmatprep.subr.mxu0 0.0
        %510 = vmatpush1.msra.mxu0 0.0
        %511 = vmatprep.subr.mxu0 0.0
        %512 = vmatpush1.msra.mxu0 0.0
        %513 = vmatprep.subr.mxu0 0.0
        %514 = vmatpush1.msra.mxu0 0.0
        %515 = vmatprep.subr.mxu0 0.0
        %516 = vmatpush1.msra.mxu0 0.0
        %517 = vmatprep.subr.mxu0 0.0
        %518 = vmatpush1.msra.mxu0 0.0
        %519 = vmatprep.subr.mxu0 0.0
        %520 = vmatpush1.msra.mxu0 0.0
        %521 = vmatprep.mubr.f32.mxu0 0.0
        %522 = vmatmul.mubr.f32.gmra.mrb[0].mxu0 %v455
        %v523 = vpop.f32.mrb[0].mxu0
        %v524 = vadd.f32 0.0, %v523
        %v525 = vpop.f32.mrb[0].mxu0
        %v526 = vadd.f32 0.0, %v525
        %527 = vdwg.mxu0
        %528 = vst [vmem:[%s176] sm:$0xf] %v524
        %529 = vst [vmem:[%s176 + $0x8] sm:$0xf] %v526
        %v530 = vld [vmem:[#allocation2] sm:$0xff]
        %v531 = vld [vmem:[#allocation2 + $0x8] sm:$0xff]
        %v532 = vld [vmem:[#allocation2 + $0x10] sm:$0xff]
        %v533 = vsel %vm232, 1, 0
        %v534 = vsel %vm233, 1, 0
        %vm535 = vcmp.eq.s32.totalorder %v533, 1
        %vm536 = vcmp.eq.s32.totalorder %v534, 1
        %540 = vrot.lane.b32.xlu0 %v530, 34
        %v541 = vpop.permute.xlu0 %540
        %542 = vrot.lane.b32.xlu0 %v531, 34
        %v543 = vpop.permute.xlu0 %542
        %544 = vrot.lane.b32.xlu0 %v532, 34
        %v545 = vpop.permute.xlu0 %544
        %vm546 = vcmask 277504
        %v547 = vsel %vm546, %v541, %v543
        %v548 = vsel %vm546, %v543, %v545
        %v551 = vsel %vm535, %v547, 0.0
        %v552 = vsel %vm536, %v548, 0.0
        %553 = vst [vmem:[#allocation3] sm:$0xff] %v551
        %554 = vst [vmem:[#allocation3 + $0x8] sm:$0xff] %v552
        %v555 = vld [vmem:[#allocation2] sm:$0xff]
        %v556 = vld [vmem:[#allocation2 + $0x8] sm:$0xff]
        %v557 = vld [vmem:[#allocation2 + $0x10] sm:$0xff]
        %561 = vrot.lane.b32.xlu0 %v555, 32
        %v562 = vpop.permute.xlu0 %561
        %563 = vrot.lane.b32.xlu0 %v556, 32
        %v564 = vpop.permute.xlu0 %563
        %565 = vrot.lane.b32.xlu0 %v557, 32
        %v566 = vpop.permute.xlu0 %565
        %vm567 = vcmask 261120
        %v568 = vsel %vm567, %v562, %v564
        %v569 = vsel %vm567, %v564, %v566
        %572 = vst [vmem:[#allocation3 + $0x10] sm:$0xff] %v568
        %573 = vst [vmem:[#allocation3 + $0x18] sm:$0xff] %v569
        %v574 = vld [vmem:[#allocation2] sm:$0xff]
        %v575 = vld [vmem:[#allocation2 + $0x8] sm:$0xff]
        %v576 = vld [vmem:[#allocation2 + $0x10] sm:$0xff]
        %v577 = vsel %vm240, 1, 0
        %v578 = vsel %vm241, 1, 0
        %vm579 = vcmp.eq.s32.totalorder %v577, 1
        %vm580 = vcmp.eq.s32.totalorder %v578, 1
        %584 = vrot.lane.b32.xlu0 %v574, 30
        %v585 = vpop.permute.xlu0 %584
        %586 = vrot.lane.b32.xlu0 %v575, 30
        %v587 = vpop.permute.xlu0 %586
        %588 = vrot.lane.b32.xlu0 %v576, 30
        %v589 = vpop.permute.xlu0 %588
        %vm590 = vcmask 244736
        %v591 = vsel %vm590, %v585, %v587
        %v592 = vsel %vm590, %v587, %v589
        %v595 = vsel %vm579, %v591, 0.0
        %v596 = vsel %vm580, %v592, 0.0
        %597 = vst [vmem:[#allocation3 + $0x20] sm:$0xff] %v595
        %598 = vst [vmem:[#allocation3 + $0x28] sm:$0xff] %v596
        %v599 = vld [vmem:[#allocation2] sm:$0xff]
        %v600 = vld [vmem:[#allocation2 + $0x8] sm:$0xff]
        %v601 = vld [vmem:[#allocation2 + $0x10] sm:$0xff]
        %605 = vrot.lane.b32.xlu0 %v599, 2
        %v606 = vpop.permute.xlu0 %605
        %607 = vrot.lane.b32.xlu0 %v600, 2
        %v608 = vpop.permute.xlu0 %607
        %609 = vrot.lane.b32.xlu0 %v601, 2
        %v610 = vpop.permute.xlu0 %609
        %vm611 = vcmask 15360
        %v612 = vsel %vm611, %v606, %v608
        %v613 = vsel %vm611, %v608, %v610
        %v616 = vsel %vm535, %v612, 0.0
        %v617 = vsel %vm536, %v613, 0.0
        %618 = vst [vmem:[#allocation3 + $0x30] sm:$0xff] %v616
        %619 = vst [vmem:[#allocation3 + $0x38] sm:$0xff] %v617
        %v620 = vld [vmem:[#allocation2 + $0x8] sm:$0xff]
        %v621 = vld [vmem:[#allocation2 + $0x10] sm:$0xff]
        %622 = vst [vmem:[#allocation3 + $0x40] sm:$0xff] %v620
        %623 = vst [vmem:[#allocation3 + $0x48] sm:$0xff] %v621
        %v624 = vld [vmem:[#allocation2 + $0x8] sm:$0xff]
        %v625 = vld [vmem:[#allocation2 + $0x10] sm:$0xff]
        %v626 = vld [vmem:[#allocation2 + $0x18] sm:$0xff]
        %630 = vrot.lane.b32.xlu0 %v624, 126
        %v631 = vpop.permute.xlu0 %630
        %632 = vrot.lane.b32.xlu0 %v625, 126
        %v633 = vpop.permute.xlu0 %632
        %634 = vrot.lane.b32.xlu0 %v626, 126
        %v635 = vpop.permute.xlu0 %634
        %vm636 = vcmask 1031168
        %v637 = vsel %vm636, %v631, %v633
        %v638 = vsel %vm636, %v633, %v635
        %v641 = vsel %vm579, %v637, 0.0
        %v642 = vsel %vm580, %v638, 0.0
        %643 = vst [vmem:[#allocation3 + $0x50] sm:$0xff] %v641
        %644 = vst [vmem:[#allocation3 + $0x58] sm:$0xff] %v642
        %v645 = vld [vmem:[#allocation2 + $0x8] sm:$0xff]
        %v646 = vld [vmem:[#allocation2 + $0x10] sm:$0xff]
        %v647 = vld [vmem:[#allocation2 + $0x18] sm:$0xff]
        %651 = vrot.lane.b32.xlu0 %v645, 98
        %v652 = vpop.permute.xlu0 %651
        %653 = vrot.lane.b32.xlu0 %v646, 98
        %v654 = vpop.permute.xlu0 %653
        %655 = vrot.lane.b32.xlu0 %v647, 98
        %v656 = vpop.permute.xlu0 %655
        %vm657 = vcmask 801792
        %v658 = vsel %vm657, %v652, %v654
        %v659 = vsel %vm657, %v654, %v656
        %v662 = vsel %vm535, %v658, 0.0
        %v663 = vsel %vm536, %v659, 0.0
        %664 = vst [vmem:[#allocation3 + $0x60] sm:$0xff] %v662
        %665 = vst [vmem:[#allocation3 + $0x68] sm:$0xff] %v663
        %v666 = vld [vmem:[#allocation2 + $0x8] sm:$0xff]
        %v667 = vld [vmem:[#allocation2 + $0x10] sm:$0xff]
        %v668 = vld [vmem:[#allocation2 + $0x18] sm:$0xff]
        %672 = vrot.lane.b32.xlu0 %v666, 96
        %v673 = vpop.permute.xlu0 %672
        %674 = vrot.lane.b32.xlu0 %v667, 96
        %v675 = vpop.permute.xlu0 %674
        %676 = vrot.lane.b32.xlu0 %v668, 96
        %v677 = vpop.permute.xlu0 %676
        %vm678 = vcmask 785408
        %v679 = vsel %vm678, %v673, %v675
        %v680 = vsel %vm678, %v675, %v677
        %683 = vst [vmem:[#allocation3 + $0x70] sm:$0xff] %v679
        %684 = vst [vmem:[#allocation3 + $0x78] sm:$0xff] %v680
        %v685 = vld [vmem:[#allocation2 + $0x8] sm:$0xff]
        %v686 = vld [vmem:[#allocation2 + $0x10] sm:$0xff]
        %v687 = vld [vmem:[#allocation2 + $0x18] sm:$0xff]
        %691 = vrot.lane.b32.xlu0 %v685, 94
        %v692 = vpop.permute.xlu0 %691
        %693 = vrot.lane.b32.xlu0 %v686, 94
        %v694 = vpop.permute.xlu0 %693
        %695 = vrot.lane.b32.xlu0 %v687, 94
        %v696 = vpop.permute.xlu0 %695
        %vm697 = vcmask 769024
        %v698 = vsel %vm697, %v692, %v694
        %v699 = vsel %vm697, %v694, %v696
        %v702 = vsel %vm579, %v698, 0.0
        %v703 = vsel %vm580, %v699, 0.0
        %704 = vst [vmem:[#allocation3 + $0x80] sm:$0xff] %v702
        %705 = vst [vmem:[#allocation3 + $0x88] sm:$0xff] %v703
        %s706 = scalar_lea.vmem [#allocation6], 4
        %v707 = vld [vmem:[%s706] sm:$0xf]
        %v708 = vld [vmem:[#allocation3] sm:$0xff]
        %v709 = vld [vmem:[#allocation3 + $0x8] sm:$0xff]
        %v710 = vld [vmem:[#allocation3 + $0x10] sm:$0xff]
        %v711 = vld [vmem:[#allocation3 + $0x18] sm:$0xff]
        %v712 = vld [vmem:[#allocation3 + $0x20] sm:$0xff]
        %v713 = vld [vmem:[#allocation3 + $0x28] sm:$0xff]
        %v714 = vld [vmem:[#allocation3 + $0x30] sm:$0xff]
        %v715 = vld [vmem:[#allocation3 + $0x38] sm:$0xff]
        %v716 = vld [vmem:[#allocation3 + $0x40] sm:$0xff]
        %v717 = vld [vmem:[#allocation3 + $0x48] sm:$0xff]
        %v718 = vld [vmem:[#allocation3 + $0x50] sm:$0xff]
        %v719 = vld [vmem:[#allocation3 + $0x58] sm:$0xff]
        %v720 = vld [vmem:[#allocation3 + $0x60] sm:$0xff]
        %v721 = vld [vmem:[#allocation3 + $0x68] sm:$0xff]
        %v722 = vld [vmem:[#allocation3 + $0x70] sm:$0xff]
        %v723 = vld [vmem:[#allocation3 + $0x78] sm:$0xff]
        %v724 = vld [vmem:[#allocation3 + $0x80] sm:$0xff]
        %v725 = vld [vmem:[#allocation3 + $0x88] sm:$0xff]
        %v727 = vsel %vm453, %v707, 0
        %729 = vmatprep.subr.mxu0 %v709
        %730 = vmatpush1.msra.mxu0 %v708
        %731 = vmatprep.subr.mxu0 %v711
        %732 = vmatpush1.msra.mxu0 %v710
        %733 = vmatprep.subr.mxu0 %v713
        %734 = vmatpush1.msra.mxu0 %v712
        %735 = vmatprep.subr.mxu0 %v715
        %736 = vmatpush1.msra.mxu0 %v714
        %737 = vmatprep.subr.mxu0 %v717
        %738 = vmatpush1.msra.mxu0 %v716
        %739 = vmatprep.subr.mxu0 %v719
        %740 = vmatpush1.msra.mxu0 %v718
        %741 = vmatprep.subr.mxu0 %v721
        %742 = vmatpush1.msra.mxu0 %v720
        %743 = vmatprep.subr.mxu0 %v723
        %744 = vmatpush1.msra.mxu0 %v722
        %745 = vmatprep.subr.mxu0 %v725
        %746 = vmatpush1.msra.mxu0 %v724
        %747 = vmatprep.subr.mxu0 0.0
        %748 = vmatpush1.msra.mxu0 0.0
        %749 = vmatprep.subr.mxu0 0.0
        %750 = vmatpush1.msra.mxu0 0.0
        %751 = vmatprep.subr.mxu0 0.0
        %752 = vmatpush1.msra.mxu0 0.0
        %753 = vmatprep.subr.mxu0 0.0
        %754 = vmatpush1.msra.mxu0 0.0
        %755 = vmatprep.subr.mxu0 0.0
        %756 = vmatpush1.msra.mxu0 0.0
        %757 = vmatprep.subr.mxu0 0.0
        %758 = vmatpush1.msra.mxu0 0.0
        %759 = vmatprep.subr.mxu0 0.0
        %760 = vmatpush1.msra.mxu0 0.0
        %761 = vmatprep.subr.mxu0 0.0
        %762 = vmatpush1.msra.mxu0 0.0
        %763 = vmatprep.subr.mxu0 0.0
        %764 = vmatpush1.msra.mxu0 0.0
        %765 = vmatprep.subr.mxu0 0.0
        %766 = vmatpush1.msra.mxu0 0.0
        %767 = vmatprep.subr.mxu0 0.0
        %768 = vmatpush1.msra.mxu0 0.0
        %769 = vmatprep.subr.mxu0 0.0
        %770 = vmatpush1.msra.mxu0 0.0
        %771 = vmatprep.subr.mxu0 0.0
        %772 = vmatpush1.msra.mxu0 0.0
        %773 = vmatprep.subr.mxu0 0.0
        %774 = vmatpush1.msra.mxu0 0.0
        %775 = vmatprep.subr.mxu0 0.0
        %776 = vmatpush1.msra.mxu0 0.0
        %777 = vmatprep.subr.mxu0 0.0
        %778 = vmatpush1.msra.mxu0 0.0
        %779 = vmatprep.subr.mxu0 0.0
        %780 = vmatpush1.msra.mxu0 0.0
        %781 = vmatprep.subr.mxu0 0.0
        %782 = vmatpush1.msra.mxu0 0.0
        %783 = vmatprep.subr.mxu0 0.0
        %784 = vmatpush1.msra.mxu0 0.0
        %785 = vmatprep.subr.mxu0 0.0
        %786 = vmatpush1.msra.mxu0 0.0
        %787 = vmatprep.subr.mxu0 0.0
        %788 = vmatpush1.msra.mxu0 0.0
        %789 = vmatprep.subr.mxu0 0.0
        %790 = vmatpush1.msra.mxu0 0.0
        %791 = vmatprep.subr.mxu0 0.0
        %792 = vmatpush1.msra.mxu0 0.0
        %793 = vmatprep.mubr.f32.mxu0 0.0
        %794 = vmatmul.mubr.f32.gmra.mrb[0].mxu0 %v727
        %v795 = vpop.f32.mrb[0].mxu0
        %v796 = vadd.f32 0.0, %v795
        %v797 = vpop.f32.mrb[0].mxu0
        %v798 = vadd.f32 0.0, %v797
        %799 = vdwg.mxu0
        %v802 = vrot.slane %v796, 4
        %v803 = vrot.slane %v798, 4
        %806 = vst [vmem:[%s176] sm:$0xf0] %v802
        %807 = vst [vmem:[%s176 + $0x8] sm:$0xf0] %v803
        %v808 = vld [vmem:[#allocation2] sm:$0xff]
        %v809 = vld [vmem:[#allocation2 + $0x8] sm:$0xff]
        %v810 = vld [vmem:[#allocation2 + $0x10] sm:$0xff]
        %v811 = vsel %vm248, 1, 0
        %v812 = vsel %vm249, 1, 0
        %vm813 = vcmp.eq.s32.totalorder %v811, 1
        %vm814 = vcmp.eq.s32.totalorder %v812, 1
        %818 = vrot.lane.b32.xlu0 %v808, 85
        %v819 = vpop.permute.xlu0 %818
        %820 = vrot.lane.b32.xlu0 %v809, 85
        %v821 = vpop.permute.xlu0 %820
        %822 = vrot.lane.b32.xlu0 %v810, 85
        %v823 = vpop.permute.xlu0 %822
        %vm824 = vcmask 695296
        %v825 = vsel %vm824, %v819, %v821
        %v826 = vsel %vm824, %v821, %v823
        %v829 = vsel %vm813, %v825, 0.0
        %v830 = vsel %vm814, %v826, 0.0
        %831 = vst [vmem:[#allocation3] sm:$0xff] %v829
        %832 = vst [vmem:[#allocation3 + $0x8] sm:$0xff] %v830
        %v833 = vld [vmem:[#allocation2] sm:$0xff]
        %v834 = vld [vmem:[#allocation2 + $0x8] sm:$0xff]
        %v835 = vld [vmem:[#allocation2 + $0x10] sm:$0xff]
        %839 = vrot.lane.b32.xlu0 %v833, 80
        %v840 = vpop.permute.xlu0 %839
        %841 = vrot.lane.b32.xlu0 %v834, 80
        %v842 = vpop.permute.xlu0 %841
        %843 = vrot.lane.b32.xlu0 %v835, 80
        %v844 = vpop.permute.xlu0 %843
        %vm845 = vcmask 654336
        %v846 = vsel %vm845, %v840, %v842
        %v847 = vsel %vm845, %v842, %v844
        %850 = vst [vmem:[#allocation3 + $0x10] sm:$0xff] %v846
        %851 = vst [vmem:[#allocation3 + $0x18] sm:$0xff] %v847
        %v852 = vld [vmem:[#allocation2] sm:$0xff]
        %v853 = vld [vmem:[#allocation2 + $0x8] sm:$0xff]
        %v854 = vld [vmem:[#allocation2 + $0x10] sm:$0xff]
        %v855 = vsel %vm256, 1, 0
        %v856 = vsel %vm257, 1, 0
        %vm857 = vcmp.eq.s32.totalorder %v855, 1
        %vm858 = vcmp.eq.s32.totalorder %v856, 1
        %862 = vrot.lane.b32.xlu0 %v852, 75
        %v863 = vpop.permute.xlu0 %862
        %864 = vrot.lane.b32.xlu0 %v853, 75
        %v865 = vpop.permute.xlu0 %864
        %866 = vrot.lane.b32.xlu0 %v854, 75
        %v867 = vpop.permute.xlu0 %866
        %vm868 = vcmask 613376
        %v869 = vsel %vm868, %v863, %v865
        %v870 = vsel %vm868, %v865, %v867
        %v873 = vsel %vm857, %v869, 0.0
        %v874 = vsel %vm858, %v870, 0.0
        %875 = vst [vmem:[#allocation3 + $0x20] sm:$0xff] %v873
        %876 = vst [vmem:[#allocation3 + $0x28] sm:$0xff] %v874
        %v877 = vld [vmem:[#allocation2] sm:$0xff]
        %v878 = vld [vmem:[#allocation2 + $0x8] sm:$0xff]
        %v879 = vld [vmem:[#allocation2 + $0x10] sm:$0xff]
        %883 = vrot.lane.b32.xlu0 %v877, 5
        %v884 = vpop.permute.xlu0 %883
        %885 = vrot.lane.b32.xlu0 %v878, 5
        %v886 = vpop.permute.xlu0 %885
        %887 = vrot.lane.b32.xlu0 %v879, 5
        %v888 = vpop.permute.xlu0 %887
        %vm889 = vcmask 39936
        %v890 = vsel %vm889, %v884, %v886
        %v891 = vsel %vm889, %v886, %v888
        %v894 = vsel %vm813, %v890, 0.0
        %v895 = vsel %vm814, %v891, 0.0
        %896 = vst [vmem:[#allocation3 + $0x30] sm:$0xff] %v894
        %897 = vst [vmem:[#allocation3 + $0x38] sm:$0xff] %v895
        %v898 = vld [vmem:[#allocation2 + $0x8] sm:$0xff]
        %v899 = vld [vmem:[#allocation2 + $0x10] sm:$0xff]
        %900 = vst [vmem:[#allocation3 + $0x40] sm:$0xff] %v898
        %901 = vst [vmem:[#allocation3 + $0x48] sm:$0xff] %v899
        %v902 = vld [vmem:[#allocation2 + $0x8] sm:$0xff]
        %v903 = vld [vmem:[#allocation2 + $0x10] sm:$0xff]
        %v904 = vld [vmem:[#allocation2 + $0x18] sm:$0xff]
        %908 = vrot.lane.b32.xlu0 %v902, 123
        %v909 = vpop.permute.xlu0 %908
        %910 = vrot.lane.b32.xlu0 %v903, 123
        %v911 = vpop.permute.xlu0 %910
        %912 = vrot.lane.b32.xlu0 %v904, 123
        %v913 = vpop.permute.xlu0 %912
        %vm914 = vcmask 1006592
        %v915 = vsel %vm914, %v909, %v911
        %v916 = vsel %vm914, %v911, %v913
        %v919 = vsel %vm857, %v915, 0.0
        %v920 = vsel %vm858, %v916, 0.0
        %921 = vst [vmem:[#allocation3 + $0x50] sm:$0xff] %v919
        %922 = vst [vmem:[#allocation3 + $0x58] sm:$0xff] %v920
        %v923 = vld [vmem:[#allocation2 + $0x8] sm:$0xff]
        %v924 = vld [vmem:[#allocation2 + $0x10] sm:$0xff]
        %v925 = vld [vmem:[#allocation2 + $0x18] sm:$0xff]
        %929 = vrot.lane.b32.xlu0 %v923, 53
        %v930 = vpop.permute.xlu0 %929
        %931 = vrot.lane.b32.xlu0 %v924, 53
        %v932 = vpop.permute.xlu0 %931
        %933 = vrot.lane.b32.xlu0 %v925, 53
        %v934 = vpop.permute.xlu0 %933
        %vm935 = vcmask 433152
        %v936 = vsel %vm935, %v930, %v932
        %v937 = vsel %vm935, %v932, %v934
        %v940 = vsel %vm813, %v936, 0.0
        %v941 = vsel %vm814, %v937, 0.0
        %942 = vst [vmem:[#allocation3 + $0x60] sm:$0xff] %v940
        %943 = vst [vmem:[#allocation3 + $0x68] sm:$0xff] %v941
        %v944 = vld [vmem:[#allocation2 + $0x8] sm:$0xff]
        %v945 = vld [vmem:[#allocation2 + $0x10] sm:$0xff]
        %v946 = vld [vmem:[#allocation2 + $0x18] sm:$0xff]
        %950 = vrot.lane.b32.xlu0 %v944, 48
        %v951 = vpop.permute.xlu0 %950
        %952 = vrot.lane.b32.xlu0 %v945, 48
        %v953 = vpop.permute.xlu0 %952
        %954 = vrot.lane.b32.xlu0 %v946, 48
        %v955 = vpop.permute.xlu0 %954
        %vm956 = vcmask 392192
        %v957 = vsel %vm956, %v951, %v953
        %v958 = vsel %vm956, %v953, %v955
        %961 = vst [vmem:[#allocation3 + $0x70] sm:$0xff] %v957
        %962 = vst [vmem:[#allocation3 + $0x78] sm:$0xff] %v958
        %v963 = vld [vmem:[#allocation2 + $0x8] sm:$0xff]
        %v964 = vld [vmem:[#allocation2 + $0x10] sm:$0xff]
        %v965 = vld [vmem:[#allocation2 + $0x18] sm:$0xff]
        %969 = vrot.lane.b32.xlu0 %v963, 43
        %v970 = vpop.permute.xlu0 %969
        %971 = vrot.lane.b32.xlu0 %v964, 43
        %v972 = vpop.permute.xlu0 %971
        %973 = vrot.lane.b32.xlu0 %v965, 43
        %v974 = vpop.permute.xlu0 %973
        %vm975 = vcmask 351232
        %v976 = vsel %vm975, %v970, %v972
        %v977 = vsel %vm975, %v972, %v974
        %v980 = vsel %vm857, %v976, 0.0
        %v981 = vsel %vm858, %v977, 0.0
        %982 = vst [vmem:[#allocation3 + $0x80] sm:$0xff] %v980
        %983 = vst [vmem:[#allocation3 + $0x88] sm:$0xff] %v981
        %s984 = scalar_lea.vmem [#allocation6], 8
        %v985 = vld [vmem:[%s984] sm:$0xf]
        %v986 = vld [vmem:[#allocation3] sm:$0xff]
        %v987 = vld [vmem:[#allocation3 + $0x8] sm:$0xff]
        %v988 = vld [vmem:[#allocation3 + $0x10] sm:$0xff]
        %v989 = vld [vmem:[#allocation3 + $0x18] sm:$0xff]
        %v990 = vld [vmem:[#allocation3 + $0x20] sm:$0xff]
        %v991 = vld [vmem:[#allocation3 + $0x28] sm:$0xff]
        %v992 = vld [vmem:[#allocation3 + $0x30] sm:$0xff]
        %v993 = vld [vmem:[#allocation3 + $0x38] sm:$0xff]
        %v994 = vld [vmem:[#allocation3 + $0x40] sm:$0xff]
        %v995 = vld [vmem:[#allocation3 + $0x48] sm:$0xff]
        %v996 = vld [vmem:[#allocation3 + $0x50] sm:$0xff]
        %v997 = vld [vmem:[#allocation3 + $0x58] sm:$0xff]
        %v998 = vld [vmem:[#allocation3 + $0x60] sm:$0xff]
        %v999 = vld [vmem:[#allocation3 + $0x68] sm:$0xff]
        %v1000 = vld [vmem:[#allocation3 + $0x70] sm:$0xff]
        %v1001 = vld [vmem:[#allocation3 + $0x78] sm:$0xff]
        %v1002 = vld [vmem:[#allocation3 + $0x80] sm:$0xff]
        %v1003 = vld [vmem:[#allocation3 + $0x88] sm:$0xff]
        %v1005 = vsel %vm453, %v985, 0
        %1007 = vmatprep.subr.mxu0 %v987
        %1008 = vmatpush1.msra.mxu0 %v986
        %1009 = vmatprep.subr.mxu0 %v989
        %1010 = vmatpush1.msra.mxu0 %v988
        %1011 = vmatprep.subr.mxu0 %v991
        %1012 = vmatpush1.msra.mxu0 %v990
        %1013 = vmatprep.subr.mxu0 %v993
        %1014 = vmatpush1.msra.mxu0 %v992
        %1015 = vmatprep.subr.mxu0 %v995
        %1016 = vmatpush1.msra.mxu0 %v994
        %1017 = vmatprep.subr.mxu0 %v997
        %1018 = vmatpush1.msra.mxu0 %v996
        %1019 = vmatprep.subr.mxu0 %v999
        %1020 = vmatpush1.msra.mxu0 %v998
        %1021 = vmatprep.subr.mxu0 %v1001
        %1022 = vmatpush1.msra.mxu0 %v1000
        %1023 = vmatprep.subr.mxu0 %v1003
        %1024 = vmatpush1.msra.mxu0 %v1002
        %1025 = vmatprep.subr.mxu0 0.0
        %1026 = vmatpush1.msra.mxu0 0.0
        %1027 = vmatprep.subr.mxu0 0.0
        %1028 = vmatpush1.msra.mxu0 0.0
        %1029 = vmatprep.subr.mxu0 0.0
        %1030 = vmatpush1.msra.mxu0 0.0
        %1031 = vmatprep.subr.mxu0 0.0
        %1032 = vmatpush1.msra.mxu0 0.0
        %1033 = vmatprep.subr.mxu0 0.0
        %1034 = vmatpush1.msra.mxu0 0.0
        %1035 = vmatprep.subr.mxu0 0.0
        %1036 = vmatpush1.msra.mxu0 0.0
        %1037 = vmatprep.subr.mxu0 0.0
        %1038 = vmatpush1.msra.mxu0 0.0
        %1039 = vmatprep.subr.mxu0 0.0
        %1040 = vmatpush1.msra.mxu0 0.0
        %1041 = vmatprep.subr.mxu0 0.0
        %1042 = vmatpush1.msra.mxu0 0.0
        %1043 = vmatprep.subr.mxu0 0.0
        %1044 = vmatpush1.msra.mxu0 0.0
        %1045 = vmatprep.subr.mxu0 0.0
        %1046 = vmatpush1.msra.mxu0 0.0
        %1047 = vmatprep.subr.mxu0 0.0
        %1048 = vmatpush1.msra.mxu0 0.0
        %1049 = vmatprep.subr.mxu0 0.0
        %1050 = vmatpush1.msra.mxu0 0.0
        %1051 = vmatprep.subr.mxu0 0.0
        %1052 = vmatpush1.msra.mxu0 0.0
        %1053 = vmatprep.subr.mxu0 0.0
        %1054 = vmatpush1.msra.mxu0 0.0
        %1055 = vmatprep.subr.mxu0 0.0
        %1056 = vmatpush1.msra.mxu0 0.0
        %1057 = vmatprep.subr.mxu0 0.0
        %1058 = vmatpush1.msra.mxu0 0.0
        %1059 = vmatprep.subr.mxu0 0.0
        %1060 = vmatpush1.msra.mxu0 0.0
        %1061 = vmatprep.subr.mxu0 0.0
        %1062 = vmatpush1.msra.mxu0 0.0
        %1063 = vmatprep.subr.mxu0 0.0
        %1064 = vmatpush1.msra.mxu0 0.0
        %1065 = vmatprep.subr.mxu0 0.0
        %1066 = vmatpush1.msra.mxu0 0.0
        %1067 = vmatprep.subr.mxu0 0.0
        %1068 = vmatpush1.msra.mxu0 0.0
        %1069 = vmatprep.subr.mxu0 0.0
        %1070 = vmatpush1.msra.mxu0 0.0
        %1071 = vmatprep.mubr.f32.mxu0 0.0
        %1072 = vmatmul.mubr.f32.gmra.mrb[0].mxu0 %v1005
        %v1073 = vpop.f32.mrb[0].mxu0
        %v1074 = vadd.f32 0.0, %v1073
        %v1075 = vpop.f32.mrb[0].mxu0
        %v1076 = vadd.f32 0.0, %v1075
        %1077 = vdwg.mxu0
        %1078 = vst [vmem:[%s176 + $0x10] sm:$0xf] %v1074
        %1079 = vst [vmem:[%s176 + $0x18] sm:$0xf] %v1076
        %p1080 = scmp.lt.s32.totalorder %s17, 1
        %s1081 = scalar_select %p1080, %s17, 1
        %s1082 = smul.addr %s1081, 4
        %s1083 = smul.addr %s1082, 8
        %s1084 = scalar_lea.vmem %s2, %s1083
        // Predicated region
        $region37: #{tpu_custom_call.1} parent=27 // pred_check
          %p1085 = pneg %p82
        $region38: #{tpu_custom_call.1} parent=27 // pred_check_branch
          %1087 = sbr.rel (%p1085) target = $region40
        $region39: #{tpu_custom_call.1} parent=27 // pred_region
          _
        $region40: #{tpu_custom_call.1} parent=27 // pred_fallthru
          _
      $region28: #{tpu_custom_call.1} parent=5 // pred_fallthru
        _
      %p1088 = scmp.le.s32.totalorder 2, %s12
      // Predicated region
      $region41: #{tpu_custom_call.1} parent=5 // pred_check
        %p1089 = pneg %p1088
      $region42: #{tpu_custom_call.1} parent=5 // pred_check_branch
        %1091 = sbr.rel (%p1089) target = $region44
      $region43: #{tpu_custom_call.1} parent=5 // pred_region
        %s1092 = ssub.s32 %s12, 2
        // Predicated region
        $region45: #{tpu_custom_call.1} parent=43 // pred_check
          %p1093 = pneg %p88
        $region46: #{tpu_custom_call.1} parent=43 // pred_check_branch
          %1095 = sbr.rel (%p1093) target = $region48
        $region47: #{tpu_custom_call.1} parent=43 // pred_region
          %p1096 = scmp.lt.s32.totalorder %s18, 1
          %s1097 = scalar_select %p1096, %s18, 1
          %s1098 = smul.addr %s1097, 4
          %s1099 = smul.addr %s1098, 8
          %s1100 = scalar_lea.vmem %s2, %s1099
        $region48: #{tpu_custom_call.1} parent=43 // pred_fallthru
          _
      $region44: #{tpu_custom_call.1} parent=5 // pred_fallthru
        _
    $region6: #{tpu_custom_call.1} parent=1 // loop_footer
      %s16 = sadd.s32 1, %s12
    $region7: #{tpu_custom_call.1} parent=1 // loop_footer_branch
      %11 = sbr.rel target = $region3
    $region8: #{tpu_custom_call.1} parent=1 // loop_exit
      _
    %1101 = vsyncpa [#allocation5], 1
    %s1102 = scalar_lea.sflag [#allocation5], 1
    %1103 = vsyncpa %s1102, 1
    %1104 = vsyncpa [#allocation7], 1

</llo_original>
